<compile_context>
chip_gen: v6e
topology: v6e:2x2x1
jax: 0.10.0
libtpu: 0.0.40
codegen_flags: <defaults>
</compile_context>

<pallas_src>
import jax
import jax.numpy as jnp
from jax.experimental import pallas as pl
from jax.experimental.pallas import tpu as pltpu

# ----- configuration -----
B = 2            # batch
N_IN = 2         # n_in_channels (audio channels)
COND_IN = 8      # cond_in_channels (mel channels)
N_CHANNELS = 32  # n_channels
N_LAYERS = 2     # n_layers
KSIZE = 3        # kernel_size (dilated in_layer convs)
T = 256          # time steps per batch element
BT = B * T       # batch folded into lane axis

C = N_CHANNELS
TWO_C = 2 * N_CHANNELS
X_CH = N_IN + COND_IN                                # 10 input channels (audio ++ spect)
SC_ROWS = N_CHANNELS + 2 * N_CHANNELS * N_LAYERS     # 160 rows for fused start+cond

# ---- weight-slab row offsets (all multiples of 8) ----
ROW_SC = 0
ROW_IN = [SC_ROWS + i * TWO_C for i in range(N_LAYERS)]          # 160, 224
RS_ROWS = [TWO_C if i < N_LAYERS - 1 else C for i in range(N_LAYERS)]
ROW_RS = []
_r = ROW_IN[-1] + TWO_C
for _i in range(N_LAYERS):
    ROW_RS.append(_r)
    _r += RS_ROWS[_i]                                            # 288, 352
ROW_END = _r                                                     # 384
R_TOTAL = ROW_END + 2 * N_IN                                     # 388
SLAB_ROWS = ((R_TOTAL + 7) // 8) * 8                             # 392
SLAB_COLS = 128
BIAS_COL = SLAB_COLS - 1


# ------------------- Pallas kernel -------------------
def wn_kernel(x_ref, w_ref, out_ref):
    """Single grid step; all activations (C, B*T) live in VMEM."""
    f32 = jnp.float32
    x = x_ref[...]                                               # (X_CH, BT)

    # fused start + cond 1x1 convs (block-diagonal weight)
    w_sc = w_ref[ROW_SC:ROW_SC + SC_ROWS, 0:X_CH]
    b_sc = w_ref[ROW_SC:ROW_SC + SC_ROWS, BIAS_COL:BIAS_COL + 1]
    hc = jnp.dot(w_sc, x, preferred_element_type=f32) + b_sc     # (160, BT)
    h = hc[:C]                                                   # audio stream after `start`
    cond = hc[C:]                                                # (2*C*L, BT) conditioning

    # per-batch time index (batch folded into lanes); hoisted out of the loops
    t_in = jax.lax.broadcasted_iota(jnp.int32, (C, BT), 1) % T

    output = None
    for i in range(N_LAYERS):
        d = 2 ** i  # dilation

        # dilated "same" conv (C -> 2C): stack the K shifted/masked taps and do
        # ONE matmul of contraction depth K*C (better MXU fill, MRB/MRF accum).
        left = jnp.where(t_in >= d, pltpu.roll(h, shift=d, axis=1), 0.0)       # x[t-d]
        right = jnp.where(t_in < T - d, pltpu.roll(h, shift=BT - d, axis=1), 0.0)  # x[t+d]
        x_stack = jnp.concatenate([left, h, right], axis=0)      # (K*C, BT)

        r0 = ROW_IN[i]
        w_in = w_ref[r0:r0 + TWO_C, 0:KSIZE * C]                 # (2C, K*C)
        b_in = w_ref[r0:r0 + TWO_C, BIAS_COL:BIAS_COL + 1]
        in_act = (jnp.dot(w_in, x_stack, preferred_element_type=f32)
                  + b_in + cond[i * TWO_C:(i + 1) * TWO_C])

        # GTU: tanh(first half) * sigmoid(second half)
        acts = jnp.tanh(in_act[:C]) * jax.nn.sigmoid(in_act[C:])

        # res_skip 1x1 conv — true per-layer shape (no dead zero-padded half)
        rr = ROW_RS[i]
        nr = RS_ROWS[i]
        w_rs = w_ref[rr:rr + nr, 0:C]
        b_rs = w_ref[rr:rr + nr, BIAS_COL:BIAS_COL + 1]
        rs = jnp.dot(w_rs, acts, preferred_element_type=f32) + b_rs
        if i < N_LAYERS - 1:
            h = h + rs[:C]                                       # residual into audio stream
            skip = rs[C:]
        else:
            skip = rs
        output = skip if i == 0 else output + skip

    # end: 1x1 conv (C -> 2*n_in); single lane-dense store, chunked in wrapper
    w_end = w_ref[ROW_END:ROW_END + 2 * N_IN, 0:C]
    b_end = w_ref[ROW_END:ROW_END + 2 * N_IN, BIAS_COL:BIAS_COL + 1]
    out_ref[...] = (jnp.dot(w_end, output, preferred_element_type=f32)
                    + b_end).astype(out_ref.dtype)


def wn_forward(audio, spect, kp):
    """audio (B, N_IN, T), spect (B, COND_IN, T); kp['slab'] packed weights."""
    # fold batch into the lane axis: (B, C, T) -> (C, B*T)
    x = jnp.concatenate([audio, spect], axis=1)                  # (B, X_CH, T)
    x = jnp.transpose(x, (1, 0, 2)).reshape(X_CH, BT)

    # TODO(synk): on v7x, split the folded lane axis across a size-2 "parallel"
    # grid (with dilation-wide halos) so both TensorCores get work; a single
    # step only uses one TC there.
    out = pl.pallas_call(
        wn_kernel,
        out_shape=jax.ShapeDtypeStruct((2 * N_IN, BT), jnp.float32),
        grid_spec=pltpu.PrefetchScalarGridSpec(
            num_scalar_prefetch=0,
            grid=(1,),
            in_specs=[
                pl.BlockSpec((X_CH, BT), lambda i: (0, 0)),
                pl.BlockSpec((SLAB_ROWS, SLAB_COLS), lambda i: (0, 0)),
            ],
            out_specs=pl.BlockSpec((2 * N_IN, BT), lambda i: (0, 0)),
        ),
        compiler_params=pltpu.CompilerParams(
            dimension_semantics=("arbitrary",)),
    )(x, kp['slab'])

    out = out.reshape(2 * N_IN, B, T).transpose(1, 0, 2)         # (B, 2*N_IN, T)
    return out[:, :N_IN], out[:, N_IN:]


# ------------------- plain-JAX reference (for self-check) -------------------
def conv1d_ref(x, w, b, dilation=1):
    # x: (B, Cin, T), w: (Cout, Cin, K), b: (Cout,)
    k = w.shape[-1]
    pad = (k * dilation - dilation) // 2
    y = jax.lax.conv_general_dilated(
        x, w, window_strides=(1,), padding=[(pad, pad)],
        rhs_dilation=(dilation,), dimension_numbers=('NCH', 'OIH', 'NCH'))
    return y + b[None, :, None]


def wn_reference(audio, spect, p):
    a = conv1d_ref(audio, p['start_w'], p['start_b'])
    c = conv1d_ref(spect, p['cond_w'], p['cond_b'])
    output = None
    for i in range(N_LAYERS):
        spec = c[:, i * 2 * N_CHANNELS:(i + 1) * 2 * N_CHANNELS, :]
        in_act = conv1d_ref(a, p['in_w'][i], p['in_b'][i], dilation=2 ** i) + spec
        acts = jnp.tanh(in_act[:, :N_CHANNELS]) * jax.nn.sigmoid(in_act[:, N_CHANNELS:])
        rs = conv1d_ref(acts, p['rs_w'][i], p['rs_b'][i])
        if i < N_LAYERS - 1:
            a = a + rs[:, :N_CHANNELS]
            skip = rs[:, N_CHANNELS:]
        else:
            skip = rs
        output = skip if i == 0 else output + skip
    end = conv1d_ref(output, p['end_w'], p['end_b'])
    return end[:, :N_IN], end[:, N_IN:]


# ------------------- parameter construction -------------------
def make_params(key):
    ks = jax.random.split(key, 16)
    s = 0.1
    p = {
        'start_w': jax.random.normal(ks[0], (N_CHANNELS, N_IN, 1)) * s,
        'start_b': jax.random.normal(ks[1], (N_CHANNELS,)) * s,
        'cond_w': jax.random.normal(ks[2], (2 * N_CHANNELS * N_LAYERS, COND_IN, 1)) * s,
        'cond_b': jax.random.normal(ks[3], (2 * N_CHANNELS * N_LAYERS,)) * s,
        'in_w': [jax.random.normal(ks[4 + i], (2 * N_CHANNELS, N_CHANNELS, KSIZE)) * s
                 for i in range(N_LAYERS)],
        'in_b': [jax.random.normal(ks[6 + i], (2 * N_CHANNELS,)) * s
                 for i in range(N_LAYERS)],
        'rs_w': [jax.random.normal(
                    ks[8 + i],
                    (RS_ROWS[i], N_CHANNELS, 1)) * s
                 for i in range(N_LAYERS)],
        'rs_b': [jax.random.normal(ks[10 + i], (RS_ROWS[i],)) * s
                 for i in range(N_LAYERS)],
        # NOTE: PyTorch zero-inits the end conv; random here so the kernel is exercised.
        'end_w': jax.random.normal(ks[12], (2 * N_IN, N_CHANNELS, 1)) * s,
        'end_b': jax.random.normal(ks[13], (2 * N_IN,)) * s,
    }
    return p


def to_kernel_params(p):
    """Pack ALL weights/biases into one (SLAB_ROWS, 128) f32 slab.

    Weights left-aligned in columns [0:width); the bias for each block sits in
    column BIAS_COL of the same rows.
    """
    slab = jnp.zeros((SLAB_ROWS, SLAB_COLS), jnp.float32)

    def put(slab, row, w, b):
        w = jnp.asarray(w, jnp.float32)
        b = jnp.asarray(b, jnp.float32)
        slab = slab.at[row:row + w.shape[0], 0:w.shape[1]].set(w)
        slab = slab.at[row:row + b.shape[0], BIAS_COL].set(b)
        return slab

    # fused start + cond: block-diagonal (160, 10)
    w_sc = jnp.zeros((SC_ROWS, X_CH), jnp.float32)
    w_sc = w_sc.at[:C, :N_IN].set(p['start_w'][:, :, 0])
    w_sc = w_sc.at[C:, N_IN:].set(p['cond_w'][:, :, 0])
    b_sc = jnp.concatenate([p['start_b'], p['cond_b']])
    slab = put(slab, ROW_SC, w_sc, b_sc)

    for i in range(N_LAYERS):
        # (2C, C, K) -> (2C, K, C) -> (2C, K*C): column k*C + c holds W[:, c, k]
        w_in = jnp.transpose(p['in_w'][i], (0, 2, 1)).reshape(TWO_C, KSIZE * C)
        slab = put(slab, ROW_IN[i], w_in, p['in_b'][i])
        slab = put(slab, ROW_RS[i], p['rs_w'][i][:, :, 0], p['rs_b'][i])

    slab = put(slab, ROW_END, p['end_w'][:, :, 0], p['end_b'])
    return {'slab': slab}


if __name__ == "__main__":
    key = jax.random.PRNGKey(0)
    k_a, k_s, k_p = jax.random.split(key, 3)

    audio = jax.random.normal(k_a, (B, N_IN, T), dtype=jnp.float32)
    spect = jax.random.normal(k_s, (B, COND_IN, T), dtype=jnp.float32)

    params = make_params(k_p)
    kparams = to_kernel_params(params)

    out_a, out_b = wn_forward(audio, spect, kparams)
    out_a = jax.block_until_ready(out_a)
    out_b = jax.block_until_ready(out_b)

    ref_a, ref_b = wn_reference(audio, spect, params)
    assert jnp.allclose(out_a, ref_a, atol=1e-4, rtol=1e-4), "out_a mismatch"
    assert jnp.allclose(out_b, ref_b, atol=1e-4, rtol=1e-4), "out_b mismatch"

    print("KERNEL_OK")
</pallas_src>

<mosaic_0001>
module attributes {stable_mosaic.version = 11 : i64} {
  func.func @wn_kernel(%arg0: i32, %arg1: memref<10x512xf32, #tpu.memory_space<vmem>>, %arg2: memref<392x128xf32, #tpu.memory_space<vmem>>, %arg3: memref<4x512xf32, #tpu.memory_space<vmem>>) attributes {dimension_semantics = [#tpu.dimension_semantics<arbitrary>], iteration_bounds = array<i64: 1>, scalar_prefetch = 0 : i64, scratch_operands = 0 : i64, tpu.core_type = #tpu.core_type<tc>, window_params = [{pipeline_mode = #tpu.pipeline_mode<synchronous>, transform_indices = @transform_0, window_bounds = array<i64: 10, 512>}, {pipeline_mode = #tpu.pipeline_mode<synchronous>, transform_indices = @transform_1, window_bounds = array<i64: 392, 128>}, {pipeline_mode = #tpu.pipeline_mode<synchronous>, transform_indices = @transform_2, window_bounds = array<i64: 4, 512>}]} {
    %c0 = arith.constant 0 : index
    %c0_0 = arith.constant 0 : index
    %0 = vector.load %arg1[%c0, %c0_0] : memref<10x512xf32, #tpu.memory_space<vmem>>, vector<10x512xf32>
    %c0_1 = arith.constant 0 : index
    %c0_2 = arith.constant 0 : index
    %1 = vector.load %arg2[%c0_1, %c0_2] : memref<392x128xf32, #tpu.memory_space<vmem>>, vector<160x10xf32>
    %c0_3 = arith.constant 0 : index
    %c127 = arith.constant 127 : index
    %2 = vector.load %arg2[%c0_3, %c127] : memref<392x128xf32, #tpu.memory_space<vmem>>, vector<160x1xf32>
    %cst = arith.constant dense<0.000000e+00> : vector<160x512xf32>
    %3 = tpu.matmul %1, %0, %cst {dimension_numbers = #tpu.dot_dimension_numbers<[1], [0], [0], [1], [0, 0, 1, 1], [], []>} : vector<160x10xf32>, vector<10x512xf32>, vector<160x512xf32> -> vector<160x512xf32>
    %4 = vector.broadcast %2 : vector<160x1xf32> to vector<160x512xf32>
    %5 = arith.addf %3, %4 : vector<160x512xf32>
    %6 = vector.extract_strided_slice %5 {offsets = [0, 0], sizes = [32, 512], strides = [1, 1]} : vector<160x512xf32> to vector<32x512xf32>
    %7 = vector.extract_strided_slice %5 {offsets = [32, 0], sizes = [128, 512], strides = [1, 1]} : vector<160x512xf32> to vector<128x512xf32>
    %8 = tpu.iota {dimensions = array<i32: 1>} : vector<32x512xi32>
    %c256_i32 = arith.constant 256 : i32
    %c0_i32 = arith.constant 0 : i32
    %9 = arith.cmpi eq, %c256_i32, %c0_i32 : i32
    %c1_i32 = arith.constant 1 : i32
    %10 = arith.select %9, %c1_i32, %c256_i32 : i32
    %11 = vector.broadcast %10 : i32 to vector<32x512xi32>
    %12 = arith.remsi %8, %11 : vector<32x512xi32>
    %c0_i32_4 = arith.constant 0 : i32
    %13 = vector.broadcast %c0_i32_4 : i32 to vector<32x512xi32>
    %14 = arith.cmpi ne, %12, %13 : vector<32x512xi32>
    %c0_i32_5 = arith.constant 0 : i32
    %15 = vector.broadcast %c0_i32_5 : i32 to vector<32x512xi32>
    %16 = arith.cmpi slt, %12, %15 : vector<32x512xi32>
    %c0_i32_6 = arith.constant 0 : i32
    %17 = arith.cmpi slt, %10, %c0_i32_6 : i32
    %18 = vector.broadcast %17 : i1 to vector<32x512xi1>
    %19 = vector.broadcast %18 : vector<32x512xi1> to vector<32x512xi1>
    %20 = arith.xori %16, %19 : vector<32x512xi1>
    %21 = arith.andi %20, %14 : vector<32x512xi1>
    %22 = vector.broadcast %10 : i32 to vector<32x512xi32>
    %23 = arith.addi %12, %22 : vector<32x512xi32>
    %24 = arith.select %21, %23, %12 : vector<32x512xi1>, vector<32x512xi32>
    %c1_i32_7 = arith.constant 1 : i32
    %25 = vector.broadcast %c1_i32_7 : i32 to vector<32x512xi32>
    %26 = arith.cmpi sge, %24, %25 : vector<32x512xi32>
    %c1_i32_8 = arith.constant 1 : i32
    %27 = tpu.dynamic_rotate %6 by %c1_i32_8 dim 1 : vector<32x512xf32>, i32 -> vector<32x512xf32>
    %cst_9 = arith.constant 0.000000e+00 : f32
    %28 = vector.broadcast %cst_9 : f32 to vector<32x512xf32>
    %29 = arith.select %26, %27, %28 : vector<32x512xi1>, vector<32x512xf32>
    %c255_i32 = arith.constant 255 : i32
    %30 = vector.broadcast %c255_i32 : i32 to vector<32x512xi32>
    %31 = arith.cmpi slt, %24, %30 : vector<32x512xi32>
    %c511_i32 = arith.constant 511 : i32
    %32 = tpu.dynamic_rotate %6 by %c511_i32 dim 1 : vector<32x512xf32>, i32 -> vector<32x512xf32>
    %cst_10 = arith.constant 0.000000e+00 : f32
    %33 = vector.broadcast %cst_10 : f32 to vector<32x512xf32>
    %34 = arith.select %31, %32, %33 : vector<32x512xi1>, vector<32x512xf32>
    %35 = tpu.concatenate %29, %6, %34 in 0 : vector<32x512xf32>, vector<32x512xf32>, vector<32x512xf32> -> vector<96x512xf32>
    %c160 = arith.constant 160 : index
    %c0_11 = arith.constant 0 : index
    %36 = vector.load %arg2[%c160, %c0_11] : memref<392x128xf32, #tpu.memory_space<vmem>>, vector<64x96xf32>
    %c160_12 = arith.constant 160 : index
    %c127_13 = arith.constant 127 : index
    %37 = vector.load %arg2[%c160_12, %c127_13] : memref<392x128xf32, #tpu.memory_space<vmem>>, vector<64x1xf32>
    %cst_14 = arith.constant dense<0.000000e+00> : vector<64x512xf32>
    %38 = tpu.matmul %36, %35, %cst_14 {dimension_numbers = #tpu.dot_dimension_numbers<[1], [0], [0], [1], [0, 0, 1, 1], [], []>} : vector<64x96xf32>, vector<96x512xf32>, vector<64x512xf32> -> vector<64x512xf32>
    %39 = vector.broadcast %37 : vector<64x1xf32> to vector<64x512xf32>
    %40 = arith.addf %38, %39 : vector<64x512xf32>
    %41 = vector.extract_strided_slice %7 {offsets = [0, 0], sizes = [64, 512], strides = [1, 1]} : vector<128x512xf32> to vector<64x512xf32>
    %42 = arith.addf %40, %41 : vector<64x512xf32>
    %43 = vector.extract_strided_slice %42 {offsets = [0, 0], sizes = [32, 512], strides = [1, 1]} : vector<64x512xf32> to vector<32x512xf32>
    %44 = math.tanh %43 : vector<32x512xf32>
    %45 = vector.extract_strided_slice %42 {offsets = [32, 0], sizes = [32, 512], strides = [1, 1]} : vector<64x512xf32> to vector<32x512xf32>
    %46 = arith.negf %45 : vector<32x512xf32>
    %47 = math.exp %46 : vector<32x512xf32>
    %cst_15 = arith.constant 1.000000e+00 : f32
    %48 = vector.broadcast %cst_15 : f32 to vector<32x512xf32>
    %49 = arith.addf %48, %47 : vector<32x512xf32>
    %50 = arith.divf %48, %49 : vector<32x512xf32>
    %51 = arith.mulf %44, %50 : vector<32x512xf32>
    %c288 = arith.constant 288 : index
    %c0_16 = arith.constant 0 : index
    %52 = vector.load %arg2[%c288, %c0_16] : memref<392x128xf32, #tpu.memory_space<vmem>>, vector<64x32xf32>
    %c288_17 = arith.constant 288 : index
    %c127_18 = arith.constant 127 : index
    %53 = vector.load %arg2[%c288_17, %c127_18] : memref<392x128xf32, #tpu.memory_space<vmem>>, vector<64x1xf32>
    %cst_19 = arith.constant dense<0.000000e+00> : vector<64x512xf32>
    %54 = tpu.matmul %52, %51, %cst_19 {dimension_numbers = #tpu.dot_dimension_numbers<[1], [0], [0], [1], [0, 0, 1, 1], [], []>} : vector<64x32xf32>, vector<32x512xf32>, vector<64x512xf32> -> vector<64x512xf32>
    %55 = vector.broadcast %53 : vector<64x1xf32> to vector<64x512xf32>
    %56 = arith.addf %54, %55 : vector<64x512xf32>
    %57 = vector.extract_strided_slice %56 {offsets = [0, 0], sizes = [32, 512], strides = [1, 1]} : vector<64x512xf32> to vector<32x512xf32>
    %58 = arith.addf %6, %57 : vector<32x512xf32>
    %59 = vector.extract_strided_slice %56 {offsets = [32, 0], sizes = [32, 512], strides = [1, 1]} : vector<64x512xf32> to vector<32x512xf32>
    %c2_i32 = arith.constant 2 : i32
    %60 = vector.broadcast %c2_i32 : i32 to vector<32x512xi32>
    %61 = arith.cmpi sge, %24, %60 : vector<32x512xi32>
    %c2_i32_20 = arith.constant 2 : i32
    %62 = tpu.dynamic_rotate %58 by %c2_i32_20 dim 1 : vector<32x512xf32>, i32 -> vector<32x512xf32>
    %cst_21 = arith.constant 0.000000e+00 : f32
    %63 = vector.broadcast %cst_21 : f32 to vector<32x512xf32>
    %64 = arith.select %61, %62, %63 : vector<32x512xi1>, vector<32x512xf32>
    %c254_i32 = arith.constant 254 : i32
    %65 = vector.broadcast %c254_i32 : i32 to vector<32x512xi32>
    %66 = arith.cmpi slt, %24, %65 : vector<32x512xi32>
    %c510_i32 = arith.constant 510 : i32
    %67 = tpu.dynamic_rotate %58 by %c510_i32 dim 1 : vector<32x512xf32>, i32 -> vector<32x512xf32>
    %cst_22 = arith.constant 0.000000e+00 : f32
    %68 = vector.broadcast %cst_22 : f32 to vector<32x512xf32>
    %69 = arith.select %66, %67, %68 : vector<32x512xi1>, vector<32x512xf32>
    %70 = tpu.concatenate %64, %58, %69 in 0 : vector<32x512xf32>, vector<32x512xf32>, vector<32x512xf32> -> vector<96x512xf32>
    %c224 = arith.constant 224 : index
    %c0_23 = arith.constant 0 : index
    %71 = vector.load %arg2[%c224, %c0_23] : memref<392x128xf32, #tpu.memory_space<vmem>>, vector<64x96xf32>
    %c224_24 = arith.constant 224 : index
    %c127_25 = arith.constant 127 : index
    %72 = vector.load %arg2[%c224_24, %c127_25] : memref<392x128xf32, #tpu.memory_space<vmem>>, vector<64x1xf32>
    %cst_26 = arith.constant dense<0.000000e+00> : vector<64x512xf32>
    %73 = tpu.matmul %71, %70, %cst_26 {dimension_numbers = #tpu.dot_dimension_numbers<[1], [0], [0], [1], [0, 0, 1, 1], [], []>} : vector<64x96xf32>, vector<96x512xf32>, vector<64x512xf32> -> vector<64x512xf32>
    %74 = vector.broadcast %72 : vector<64x1xf32> to vector<64x512xf32>
    %75 = arith.addf %73, %74 : vector<64x512xf32>
    %76 = vector.extract_strided_slice %7 {offsets = [64, 0], sizes = [64, 512], strides = [1, 1]} : vector<128x512xf32> to vector<64x512xf32>
    %77 = arith.addf %75, %76 : vector<64x512xf32>
    %78 = vector.extract_strided_slice %77 {offsets = [0, 0], sizes = [32, 512], strides = [1, 1]} : vector<64x512xf32> to vector<32x512xf32>
    %79 = math.tanh %78 : vector<32x512xf32>
    %80 = vector.extract_strided_slice %77 {offsets = [32, 0], sizes = [32, 512], strides = [1, 1]} : vector<64x512xf32> to vector<32x512xf32>
    %81 = arith.negf %80 : vector<32x512xf32>
    %82 = math.exp %81 : vector<32x512xf32>
    %cst_27 = arith.constant 1.000000e+00 : f32
    %83 = vector.broadcast %cst_27 : f32 to vector<32x512xf32>
    %84 = arith.addf %83, %82 : vector<32x512xf32>
    %85 = arith.divf %83, %84 : vector<32x512xf32>
    %86 = arith.mulf %79, %85 : vector<32x512xf32>
    %c352 = arith.constant 352 : index
    %c0_28 = arith.constant 0 : index
    %87 = vector.load %arg2[%c352, %c0_28] : memref<392x128xf32, #tpu.memory_space<vmem>>, vector<32x32xf32>
    %c352_29 = arith.constant 352 : index
    %c127_30 = arith.constant 127 : index
    %88 = vector.load %arg2[%c352_29, %c127_30] : memref<392x128xf32, #tpu.memory_space<vmem>>, vector<32x1xf32>
    %cst_31 = arith.constant dense<0.000000e+00> : vector<32x512xf32>
    %89 = tpu.matmul %87, %86, %cst_31 {dimension_numbers = #tpu.dot_dimension_numbers<[1], [0], [0], [1], [0, 0, 1, 1], [], []>} : vector<32x32xf32>, vector<32x512xf32>, vector<32x512xf32> -> vector<32x512xf32>
    %90 = vector.broadcast %88 : vector<32x1xf32> to vector<32x512xf32>
    %91 = arith.addf %89, %90 : vector<32x512xf32>
    %92 = arith.addf %59, %91 : vector<32x512xf32>
    %c384 = arith.constant 384 : index
    %c0_32 = arith.constant 0 : index
    %93 = vector.load %arg2[%c384, %c0_32] : memref<392x128xf32, #tpu.memory_space<vmem>>, vector<4x32xf32>
    %c384_33 = arith.constant 384 : index
    %c127_34 = arith.constant 127 : index
    %94 = vector.load %arg2[%c384_33, %c127_34] : memref<392x128xf32, #tpu.memory_space<vmem>>, vector<4x1xf32>
    %cst_35 = arith.constant dense<0.000000e+00> : vector<4x512xf32>
    %95 = tpu.matmul %93, %92, %cst_35 {dimension_numbers = #tpu.dot_dimension_numbers<[1], [0], [0], [1], [0, 0, 1, 1], [], []>} : vector<4x32xf32>, vector<32x512xf32>, vector<4x512xf32> -> vector<4x512xf32>
    %96 = vector.broadcast %94 : vector<4x1xf32> to vector<4x512xf32>
    %97 = arith.addf %95, %96 : vector<4x512xf32>
    %c0_36 = arith.constant 0 : index
    %c0_37 = arith.constant 0 : index
    %98 = vector.load %arg3[%c0_36, %c0_37] : memref<4x512xf32, #tpu.memory_space<vmem>>, vector<4x512xf32>
    tpu.vector_store %arg3[%c0_36, %c0_37], %97 {strides = array<i32>} : memref<4x512xf32, #tpu.memory_space<vmem>>, vector<4x512xf32>,
    return
  }
  func.func @transform_0(%arg0: i32) -> (i32, i32) {
    %c0_i32 = arith.constant 0 : i32
    %c0_i32_0 = arith.constant 0 : i32
    %c0_i32_1 = arith.constant 0 : i32
    return %c0_i32, %c0_i32_0 : i32, i32
  }
  func.func @transform_1(%arg0: i32) -> (i32, i32) {
    %c0_i32 = arith.constant 0 : i32
    %c0_i32_0 = arith.constant 0 : i32
    %c0_i32_1 = arith.constant 0 : i32
    return %c0_i32, %c0_i32_0 : i32, i32
  }
  func.func @transform_2(%arg0: i32) -> (i32, i32) {
    %c0_i32 = arith.constant 0 : i32
    %c0_i32_0 = arith.constant 0 : i32
    %c0_i32_1 = arith.constant 0 : i32
    return %c0_i32, %c0_i32_0 : i32, i32
  }
}

</mosaic_0001>

<llo_original>
// kernel: tpu_custom_call.1
$region0: #{tpu_custom_call.1}
  #allocation0 [shape = 'u32[]', space=smem, size = 0x4, offset = 0x4, fixed_abs, tag = 'smem constant byte address 0x4 - core index']
  #allocation1 [shape = 'u32[144,128]{1,0:T(1,128)}', space=vmem, size = 0x12000, scoped, tag = 'internal scratch']
  %s0 = inlined_call_operand.hbm [shape: f32[10,512], index: 0, kind: input, shape index: {}]
  %s1 = inlined_call_operand.hbm [shape: f32[392,128], index: 1, kind: input, shape index: {}]
  %s2 = inlined_call_operand.hbm [shape: f32[4,512], index: 2, kind: output, shape index: {}]
  %s3 = sld [smem:[#allocation0]]
  $region26: #{tpu_custom_call.1} parent=0
    _
  %s5 = ssub.s32 1, %s3
  %s6 = scalar_select 0, %s5, %s3
  $region1: #{tpu_custom_call.1} parent=0
    #allocation2 [shape = 'u8[32768]{0}', space=vmem, size = 0x8000, scoped, tag = 'input window, operand 0, single buffered']
    #allocation3 [shape = 's32[1]{0}', space=sflag, size = 0x4, scoped, tag = 'scoped memory for tpu_custom_call.1']
    #allocation4 [shape = 's32[1]{0}', space=sflag, size = 0x4, scoped, tag = 'scoped memory for tpu_custom_call.1']
    #allocation5 [shape = 'u8[200704]{0}', space=vmem, size = 0x31000, scoped, tag = 'input window, operand 1, single buffered']
    #allocation6 [shape = 's32[1]{0}', space=sflag, size = 0x4, scoped, tag = 'scoped memory for tpu_custom_call.1']
    #allocation7 [shape = 'u8[8192]{0}', space=vmem, size = 0x2000, scoped, tag = 'output window, operand 0, single buffered']
    %7 = vsyncpa [#allocation3], 0
    %8 = vsyncpa [#allocation6], 0
    %9 = vsyncpa [#allocation4], 0
    // Predicated region
    $region2: #{tpu_custom_call.1} parent=1 // pred_check
      _
    $region3: #{tpu_custom_call.1} parent=1 // pred_check_branch
      %11 = sbr.rel (0) target = $region5
    $region4: #{tpu_custom_call.1} parent=1 // pred_region
      %s13 = ssub.s32 1024, 1024
      %14 = vsyncadd [#allocation3], %s13
      %s15 = sshll.u32 [#allocation2], 4
      %s16 = int_to_ptr.vmem [resolvable:$true] %s15
      %21 = dma.hbm_to_vmem [thread:$0]  %s0, 1024, %s16, [#allocation3], 512, 512, 32
    $region5: #{tpu_custom_call.1} parent=1 // pred_fallthru
      _
    // Predicated region
    $region6: #{tpu_custom_call.1} parent=1 // pred_check
      _
    $region7: #{tpu_custom_call.1} parent=1 // pred_check_branch
      %23 = sbr.rel (0) target = $region9
    $region8: #{tpu_custom_call.1} parent=1 // pred_region
      %s25 = ssub.s32 6272, 6272
      %26 = vsyncadd [#allocation6], %s25
      %s27 = sshll.u32 [#allocation5], 4
      %s28 = int_to_ptr.vmem [resolvable:$true] %s27
      %33 = dma.hbm_to_vmem [thread:$0]  %s1, 6272, %s28, [#allocation6], 128, 128, 8
    $region9: #{tpu_custom_call.1} parent=1 // pred_fallthru
      _
    // Predicated region
    $region10: #{tpu_custom_call.1} parent=1 // pred_check
      _
    $region11: #{tpu_custom_call.1} parent=1 // pred_check_branch
      %35 = sbr.rel (0) target = $region13
    $region12: #{tpu_custom_call.1} parent=1 // pred_region
      %36 = dma.done [#allocation3], 1024
    $region13: #{tpu_custom_call.1} parent=1 // pred_fallthru
      _
    // Predicated region
    $region14: #{tpu_custom_call.1} parent=1 // pred_check
      _
    $region15: #{tpu_custom_call.1} parent=1 // pred_check_branch
      %38 = sbr.rel (0) target = $region17
    $region16: #{tpu_custom_call.1} parent=1 // pred_region
      %39 = dma.done [#allocation6], 6272
    $region17: #{tpu_custom_call.1} parent=1 // pred_fallthru
      _
    %v40 = vld [vmem:[#allocation2] sm:$0xff]
    %v41 = vld [vmem:[#allocation2 + $0x8] sm:$0xff]
    %v42 = vld [vmem:[#allocation2 + $0x10] sm:$0xff]
    %v43 = vld [vmem:[#allocation2 + $0x18] sm:$0xff]
    %v44 = vld [vmem:[#allocation2 + $0x20] sm:$0x3]
    %v45 = vld [vmem:[#allocation2 + $0x28] sm:$0x3]
    %v46 = vld [vmem:[#allocation2 + $0x30] sm:$0x3]
    %v47 = vld [vmem:[#allocation2 + $0x38] sm:$0x3]
    %v48 = vld [vmem:[#allocation5] sm:$0xff]
    %v49 = vld [vmem:[#allocation5 + $0x8] sm:$0xff]
    %v50 = vld [vmem:[#allocation5 + $0x10] sm:$0xff]
    %v51 = vld [vmem:[#allocation5 + $0x18] sm:$0xff]
    %v52 = vld [vmem:[#allocation5 + $0x20] sm:$0xff]
    %v53 = vld [vmem:[#allocation5 + $0x28] sm:$0xff]
    %v54 = vld [vmem:[#allocation5 + $0x30] sm:$0xff]
    %v55 = vld [vmem:[#allocation5 + $0x38] sm:$0xff]
    %v56 = vld [vmem:[#allocation5 + $0x40] sm:$0xff]
    %v57 = vld [vmem:[#allocation5 + $0x48] sm:$0xff]
    %v58 = vld [vmem:[#allocation5 + $0x50] sm:$0xff]
    %v59 = vld [vmem:[#allocation5 + $0x58] sm:$0xff]
    %v60 = vld [vmem:[#allocation5 + $0x60] sm:$0xff]
    %v61 = vld [vmem:[#allocation5 + $0x68] sm:$0xff]
    %v62 = vld [vmem:[#allocation5 + $0x70] sm:$0xff]
    %v63 = vld [vmem:[#allocation5 + $0x78] sm:$0xff]
    %v64 = vld [vmem:[#allocation5 + $0x80] sm:$0xff]
    %v65 = vld [vmem:[#allocation5 + $0x88] sm:$0xff]
    %v66 = vld [vmem:[#allocation5 + $0x90] sm:$0xff]
    %v67 = vld [vmem:[#allocation5 + $0x98] sm:$0xff]
    %69 = vset.pattern.permute.xlu0 127
    %70 = vperm.xlu0 %69, %v48
    %v71 = vpop.permute.xlu0 %70
    %74 = vset.pattern.permute.xlu0 127
    %75 = vperm.xlu0 %74, %v49
    %v76 = vpop.permute.xlu0 %75
    %79 = vset.pattern.permute.xlu0 127
    %80 = vperm.xlu0 %79, %v50
    %v81 = vpop.permute.xlu0 %80
    %84 = vset.pattern.permute.xlu0 127
    %85 = vperm.xlu0 %84, %v51
    %v86 = vpop.permute.xlu0 %85
    %89 = vset.pattern.permute.xlu0 127
    %90 = vperm.xlu0 %89, %v52
    %v91 = vpop.permute.xlu0 %90
    %94 = vset.pattern.permute.xlu0 127
    %95 = vperm.xlu0 %94, %v53
    %v96 = vpop.permute.xlu0 %95
    %99 = vset.pattern.permute.xlu0 127
    %100 = vperm.xlu0 %99, %v54
    %v101 = vpop.permute.xlu0 %100
    %104 = vset.pattern.permute.xlu0 127
    %105 = vperm.xlu0 %104, %v55
    %v106 = vpop.permute.xlu0 %105
    %109 = vset.pattern.permute.xlu0 127
    %110 = vperm.xlu0 %109, %v56
    %v111 = vpop.permute.xlu0 %110
    %114 = vset.pattern.permute.xlu0 127
    %115 = vperm.xlu0 %114, %v57
    %v116 = vpop.permute.xlu0 %115
    %119 = vset.pattern.permute.xlu0 127
    %120 = vperm.xlu0 %119, %v58
    %v121 = vpop.permute.xlu0 %120
    %124 = vset.pattern.permute.xlu0 127
    %125 = vperm.xlu0 %124, %v59
    %v126 = vpop.permute.xlu0 %125
    %129 = vset.pattern.permute.xlu0 127
    %130 = vperm.xlu0 %129, %v60
    %v131 = vpop.permute.xlu0 %130
    %134 = vset.pattern.permute.xlu0 127
    %135 = vperm.xlu0 %134, %v61
    %v136 = vpop.permute.xlu0 %135
    %139 = vset.pattern.permute.xlu0 127
    %140 = vperm.xlu0 %139, %v62
    %v141 = vpop.permute.xlu0 %140
    %144 = vset.pattern.permute.xlu0 127
    %145 = vperm.xlu0 %144, %v63
    %v146 = vpop.permute.xlu0 %145
    %149 = vset.pattern.permute.xlu0 127
    %150 = vperm.xlu0 %149, %v64
    %v151 = vpop.permute.xlu0 %150
    %154 = vset.pattern.permute.xlu0 127
    %155 = vperm.xlu0 %154, %v65
    %v156 = vpop.permute.xlu0 %155
    %159 = vset.pattern.permute.xlu0 127
    %160 = vperm.xlu0 %159, %v66
    %v161 = vpop.permute.xlu0 %160
    %164 = vset.pattern.permute.xlu0 127
    %165 = vperm.xlu0 %164, %v67
    %v166 = vpop.permute.xlu0 %165
    %vm168 = vcmask 80896
    %v169 = vsel %vm168, %v48, 0
    %v171 = vsel %vm168, %v49, 0
    %v173 = vsel %vm168, %v50, 0
    %v175 = vsel %vm168, %v51, 0
    %v177 = vsel %vm168, %v52, 0
    %v179 = vsel %vm168, %v53, 0
    %v181 = vsel %vm168, %v54, 0
    %v183 = vsel %vm168, %v55, 0
    %v185 = vsel %vm168, %v56, 0
    %v187 = vsel %vm168, %v57, 0
    %v189 = vsel %vm168, %v58, 0
    %v191 = vsel %vm168, %v59, 0
    %v193 = vsel %vm168, %v60, 0
    %v195 = vsel %vm168, %v61, 0
    %v197 = vsel %vm168, %v62, 0
    %v199 = vsel %vm168, %v63, 0
    %v201 = vsel %vm168, %v64, 0
    %v203 = vsel %vm168, %v65, 0
    %v205 = vsel %vm168, %v66, 0
    %v207 = vsel %vm168, %v67, 0
    %vm209 = vcmask 1041408
    %v211 = vsel %vm209, %v44, 0
    %v214 = vsel %vm209, %v45, 0
    %v217 = vsel %vm209, %v46, 0
    %v220 = vsel %vm209, %v47, 0
    %222 = vmatprep.subr.mxu0 0.0
    %223 = vmatpush1.msra.mxu0 0.0
    %224 = vmatprep.subr.mxu0 0.0
    %225 = vmatpush1.msra.mxu0 0.0
    %226 = vmatprep.subr.mxu0 0.0
    %227 = vmatpush1.msra.mxu0 0.0
    %228 = vmatprep.subr.mxu0 0.0
    %229 = vmatpush1.msra.mxu0 0.0
    %230 = vmatprep.subr.mxu0 0.0
    %231 = vmatpush1.msra.mxu0 0.0
    %232 = vmatprep.subr.mxu0 0.0
    %233 = vmatpush1.msra.mxu0 0.0
    %234 = vmatprep.subr.mxu0 0.0
    %235 = vmatpush1.msra.mxu0 0.0
    %236 = vmatprep.subr.mxu0 0.0
    %237 = vmatpush1.msra.mxu0 0.0
    %238 = vmatprep.subr.mxu0 0.0
    %239 = vmatpush1.msra.mxu0 0.0
    %240 = vmatprep.subr.mxu0 0.0
    %241 = vmatpush1.msra.mxu0 0.0
    %242 = vmatprep.subr.mxu0 0.0
    %243 = vmatpush1.msra.mxu0 0.0
    %244 = vmatprep.subr.mxu0 0.0
    %245 = vmatpush1.msra.mxu0 0.0
    %246 = vmatprep.subr.mxu0 0.0
    %247 = vmatpush1.msra.mxu0 0.0
    %248 = vmatprep.subr.mxu0 0.0
    %249 = vmatpush1.msra.mxu0 0.0
    %250 = vmatprep.subr.mxu0 %v214
    %251 = vmatpush1.msra.mxu0 %v211
    %252 = vmatprep.subr.mxu0 %v41
    %253 = vmatpush1.msra.mxu0 %v40
    %254 = vmatprep.subr.mxu0 0.0
    %255 = vmatpush2.msra.mxu0 0.0
    %256 = vmatprep.subr.mxu0 0.0
    %257 = vmatpush2.msra.mxu0 0.0
    %258 = vmatprep.subr.mxu0 0.0
    %259 = vmatpush2.msra.mxu0 0.0
    %260 = vmatprep.subr.mxu0 0.0
    %261 = vmatpush2.msra.mxu0 0.0
    %262 = vmatprep.subr.mxu0 0.0
    %263 = vmatpush2.msra.mxu0 0.0
    %264 = vmatprep.subr.mxu0 0.0
    %265 = vmatpush2.msra.mxu0 0.0
    %266 = vmatprep.subr.mxu0 0.0
    %267 = vmatpush2.msra.mxu0 0.0
    %268 = vmatprep.subr.mxu0 0.0
    %269 = vmatpush2.msra.mxu0 0.0
    %270 = vmatprep.subr.mxu0 0.0
    %271 = vmatpush2.msra.mxu0 0.0
    %272 = vmatprep.subr.mxu0 0.0
    %273 = vmatpush2.msra.mxu0 0.0
    %274 = vmatprep.subr.mxu0 0.0
    %275 = vmatpush2.msra.mxu0 0.0
    %276 = vmatprep.subr.mxu0 0.0
    %277 = vmatpush2.msra.mxu0 0.0
    %278 = vmatprep.subr.mxu0 0.0
    %279 = vmatpush2.msra.mxu0 0.0
    %280 = vmatprep.subr.mxu0 0.0
    %281 = vmatpush2.msra.mxu0 0.0
    %282 = vmatprep.subr.mxu0 0.0
    %283 = vmatpush2.msra.mxu0 0.0
    %284 = vmatprep.subr.mxu0 0.0
    %285 = vmatpush2.msra.mxu0 0.0
    %286 = vmatprep.mubr.f32.mxu0 0.0
    %287 = vmatmul.mubr.f32.gmra.mxu0 %v169
    %v288 = vpop.f32.mrf.mxu0
    %v289 = vadd.f32 %v71, %v288
    %v290 = vpop.f32.mrf.mxu0
    %v291 = vadd.f32 %v71, %v290
    %292 = vmatprep.mubr.f32.mxu0 0.0
    %293 = vmatmul.mubr.f32.gmra.mxu0 %v171
    %v294 = vpop.f32.mrf.mxu0
    %v295 = vadd.f32 %v76, %v294
    %v296 = vpop.f32.mrf.mxu0
    %v297 = vadd.f32 %v76, %v296
    %298 = vmatprep.mubr.f32.mxu0 0.0
    %299 = vmatmul.mubr.f32.gmra.mxu0 %v173
    %v300 = vpop.f32.mrf.mxu0
    %v301 = vadd.f32 %v81, %v300
    %v302 = vpop.f32.mrf.mxu0
    %v303 = vadd.f32 %v81, %v302
    %304 = vmatprep.mubr.f32.mxu0 0.0
    %305 = vmatmul.mubr.f32.gmra.mxu0 %v175
    %v306 = vpop.f32.mrf.mxu0
    %v307 = vadd.f32 %v86, %v306
    %v308 = vpop.f32.mrf.mxu0
    %v309 = vadd.f32 %v86, %v308
    %310 = vmatprep.mubr.f32.mxu0 0.0
    %311 = vmatmul.mubr.f32.gmra.mxu0 %v177
    %v312 = vpop.f32.mrf.mxu0
    %v313 = vadd.f32 %v91, %v312
    %v314 = vpop.f32.mrf.mxu0
    %v315 = vadd.f32 %v91, %v314
    %316 = vmatprep.mubr.f32.mxu0 0.0
    %317 = vmatmul.mubr.f32.gmra.mxu0 %v179
    %v318 = vpop.f32.mrf.mxu0
    %v319 = vadd.f32 %v96, %v318
    %v320 = vpop.f32.mrf.mxu0
    %v321 = vadd.f32 %v96, %v320
    %322 = vmatprep.mubr.f32.mxu0 0.0
    %323 = vmatmul.mubr.f32.gmra.mxu0 %v181
    %v324 = vpop.f32.mrf.mxu0
    %v325 = vadd.f32 %v101, %v324
    %v326 = vpop.f32.mrf.mxu0
    %v327 = vadd.f32 %v101, %v326
    %328 = vmatprep.mubr.f32.mxu0 0.0
    %329 = vmatmul.mubr.f32.gmra.mxu0 %v183
    %v330 = vpop.f32.mrf.mxu0
    %v331 = vadd.f32 %v106, %v330
    %v332 = vpop.f32.mrf.mxu0
    %v333 = vadd.f32 %v106, %v332
    %334 = vmatprep.mubr.f32.mxu0 0.0
    %335 = vmatmul.mubr.f32.gmra.mxu0 %v185
    %v336 = vpop.f32.mrf.mxu0
    %v337 = vadd.f32 %v111, %v336
    %v338 = vpop.f32.mrf.mxu0
    %v339 = vadd.f32 %v111, %v338
    %340 = vmatprep.mubr.f32.mxu0 0.0
    %341 = vmatmul.mubr.f32.gmra.mxu0 %v187
    %v342 = vpop.f32.mrf.mxu0
    %v343 = vadd.f32 %v116, %v342
    %v344 = vpop.f32.mrf.mxu0
    %v345 = vadd.f32 %v116, %v344
    %346 = vmatprep.mubr.f32.mxu0 0.0
    %347 = vmatmul.mubr.f32.gmra.mxu0 %v189
    %v348 = vpop.f32.mrf.mxu0
    %v349 = vadd.f32 %v121, %v348
    %v350 = vpop.f32.mrf.mxu0
    %v351 = vadd.f32 %v121, %v350
    %352 = vmatprep.mubr.f32.mxu0 0.0
    %353 = vmatmul.mubr.f32.gmra.mxu0 %v191
    %v354 = vpop.f32.mrf.mxu0
    %v355 = vadd.f32 %v126, %v354
    %v356 = vpop.f32.mrf.mxu0
    %v357 = vadd.f32 %v126, %v356
    %358 = vmatprep.mubr.f32.mxu0 0.0
    %359 = vmatmul.mubr.f32.gmra.mxu0 %v193
    %v360 = vpop.f32.mrf.mxu0
    %v361 = vadd.f32 %v131, %v360
    %v362 = vpop.f32.mrf.mxu0
    %v363 = vadd.f32 %v131, %v362
    %364 = vmatprep.mubr.f32.mxu0 0.0
    %365 = vmatmul.mubr.f32.gmra.mxu0 %v195
    %v366 = vpop.f32.mrf.mxu0
    %v367 = vadd.f32 %v136, %v366
    %v368 = vpop.f32.mrf.mxu0
    %v369 = vadd.f32 %v136, %v368
    %370 = vmatprep.mubr.f32.mxu0 0.0
    %371 = vmatmul.mubr.f32.gmra.mxu0 %v197
    %v372 = vpop.f32.mrf.mxu0
    %v373 = vadd.f32 %v141, %v372
    %v374 = vpop.f32.mrf.mxu0
    %v375 = vadd.f32 %v141, %v374
    %376 = vmatprep.mubr.f32.mxu0 0.0
    %377 = vmatmul.mubr.f32.gmra.mxu0 %v199
    %v378 = vpop.f32.mrf.mxu0
    %v379 = vadd.f32 %v146, %v378
    %v380 = vpop.f32.mrf.mxu0
    %v381 = vadd.f32 %v146, %v380
    %382 = vmatprep.mubr.f32.mxu0 0.0
    %383 = vmatmul.mubr.f32.gmra.mxu0 %v201
    %v384 = vpop.f32.mrf.mxu0
    %v385 = vadd.f32 %v151, %v384
    %v386 = vpop.f32.mrf.mxu0
    %v387 = vadd.f32 %v151, %v386
    %388 = vmatprep.mubr.f32.mxu0 0.0
    %389 = vmatmul.mubr.f32.gmra.mxu0 %v203
    %v390 = vpop.f32.mrf.mxu0
    %v391 = vadd.f32 %v156, %v390
    %v392 = vpop.f32.mrf.mxu0
    %v393 = vadd.f32 %v156, %v392
    %394 = vmatprep.mubr.f32.mxu0 0.0
    %395 = vmatmul.mubr.f32.gmra.mxu0 %v205
    %v396 = vpop.f32.mrf.mxu0
    %v397 = vadd.f32 %v161, %v396
    %v398 = vpop.f32.mrf.mxu0
    %v399 = vadd.f32 %v161, %v398
    %400 = vmatprep.mubr.f32.mxu0 0.0
    %401 = vmatmul.mubr.f32.gmra.mxu0 %v207
    %v402 = vpop.f32.mrf.mxu0
    %v403 = vadd.f32 %v166, %v402
    %v404 = vpop.f32.mrf.mxu0
    %v405 = vadd.f32 %v166, %v404
    %406 = vdwg.mxu0
    %407 = vmatprep.subr.mxu0 0.0
    %408 = vmatpush1.msra.mxu0 0.0
    %409 = vmatprep.subr.mxu0 0.0
    %410 = vmatpush1.msra.mxu0 0.0
    %411 = vmatprep.subr.mxu0 0.0
    %412 = vmatpush1.msra.mxu0 0.0
    %413 = vmatprep.subr.mxu0 0.0
    %414 = vmatpush1.msra.mxu0 0.0
    %415 = vmatprep.subr.mxu0 0.0
    %416 = vmatpush1.msra.mxu0 0.0
    %417 = vmatprep.subr.mxu0 0.0
    %418 = vmatpush1.msra.mxu0 0.0
    %419 = vmatprep.subr.mxu0 0.0
    %420 = vmatpush1.msra.mxu0 0.0
    %421 = vmatprep.subr.mxu0 0.0
    %422 = vmatpush1.msra.mxu0 0.0
    %423 = vmatprep.subr.mxu0 0.0
    %424 = vmatpush1.msra.mxu0 0.0
    %425 = vmatprep.subr.mxu0 0.0
    %426 = vmatpush1.msra.mxu0 0.0
    %427 = vmatprep.subr.mxu0 0.0
    %428 = vmatpush1.msra.mxu0 0.0
    %429 = vmatprep.subr.mxu0 0.0
    %430 = vmatpush1.msra.mxu0 0.0
    %431 = vmatprep.subr.mxu0 0.0
    %432 = vmatpush1.msra.mxu0 0.0
    %433 = vmatprep.subr.mxu0 0.0
    %434 = vmatpush1.msra.mxu0 0.0
    %435 = vmatprep.subr.mxu0 %v220
    %436 = vmatpush1.msra.mxu0 %v217
    %437 = vmatprep.subr.mxu0 %v43
    %438 = vmatpush1.msra.mxu0 %v42
    %439 = vmatprep.subr.mxu0 0.0
    %440 = vmatpush2.msra.mxu0 0.0
    %441 = vmatprep.subr.mxu0 0.0
    %442 = vmatpush2.msra.mxu0 0.0
    %443 = vmatprep.subr.mxu0 0.0
    %444 = vmatpush2.msra.mxu0 0.0
    %445 = vmatprep.subr.mxu0 0.0
    %446 = vmatpush2.msra.mxu0 0.0
    %447 = vmatprep.subr.mxu0 0.0
    %448 = vmatpush2.msra.mxu0 0.0
    %449 = vmatprep.subr.mxu0 0.0
    %450 = vmatpush2.msra.mxu0 0.0
    %451 = vmatprep.subr.mxu0 0.0
    %452 = vmatpush2.msra.mxu0 0.0
    %453 = vmatprep.subr.mxu0 0.0
    %454 = vmatpush2.msra.mxu0 0.0
    %455 = vmatprep.subr.mxu0 0.0
    %456 = vmatpush2.msra.mxu0 0.0
    %457 = vmatprep.subr.mxu0 0.0
    %458 = vmatpush2.msra.mxu0 0.0
    %459 = vmatprep.subr.mxu0 0.0
    %460 = vmatpush2.msra.mxu0 0.0
    %461 = vmatprep.subr.mxu0 0.0
    %462 = vmatpush2.msra.mxu0 0.0
    %463 = vmatprep.subr.mxu0 0.0
    %464 = vmatpush2.msra.mxu0 0.0
    %465 = vmatprep.subr.mxu0 0.0
    %466 = vmatpush2.msra.mxu0 0.0
    %467 = vmatprep.subr.mxu0 0.0
    %468 = vmatpush2.msra.mxu0 0.0
    %469 = vmatprep.subr.mxu0 0.0
    %470 = vmatpush2.msra.mxu0 0.0
    %471 = vmatprep.mubr.f32.mxu0 0.0
    %472 = vmatmul.mubr.f32.gmra.mxu0 %v169
    %v473 = vpop.f32.mrf.mxu0
    %v474 = vadd.f32 %v71, %v473
    %v475 = vpop.f32.mrf.mxu0
    %v476 = vadd.f32 %v71, %v475
    %477 = vmatprep.mubr.f32.mxu0 0.0
    %478 = vmatmul.mubr.f32.gmra.mxu0 %v171
    %v479 = vpop.f32.mrf.mxu0
    %v480 = vadd.f32 %v76, %v479
    %v481 = vpop.f32.mrf.mxu0
    %v482 = vadd.f32 %v76, %v481
    %483 = vmatprep.mubr.f32.mxu0 0.0
    %484 = vmatmul.mubr.f32.gmra.mxu0 %v173
    %v485 = vpop.f32.mrf.mxu0
    %v486 = vadd.f32 %v81, %v485
    %v487 = vpop.f32.mrf.mxu0
    %v488 = vadd.f32 %v81, %v487
    %489 = vmatprep.mubr.f32.mxu0 0.0
    %490 = vmatmul.mubr.f32.gmra.mxu0 %v175
    %v491 = vpop.f32.mrf.mxu0
    %v492 = vadd.f32 %v86, %v491
    %v493 = vpop.f32.mrf.mxu0
    %v494 = vadd.f32 %v86, %v493
    %495 = vmatprep.mubr.f32.mxu0 0.0
    %496 = vmatmul.mubr.f32.gmra.mxu0 %v177
    %v497 = vpop.f32.mrf.mxu0
    %v498 = vadd.f32 %v91, %v497
    %v499 = vpop.f32.mrf.mxu0
    %v500 = vadd.f32 %v91, %v499
    %501 = vmatprep.mubr.f32.mxu0 0.0
    %502 = vmatmul.mubr.f32.gmra.mxu0 %v179
    %v503 = vpop.f32.mrf.mxu0
    %v504 = vadd.f32 %v96, %v503
    %v505 = vpop.f32.mrf.mxu0
    %v506 = vadd.f32 %v96, %v505
    %507 = vmatprep.mubr.f32.mxu0 0.0
    %508 = vmatmul.mubr.f32.gmra.mxu0 %v181
    %v509 = vpop.f32.mrf.mxu0
    %v510 = vadd.f32 %v101, %v509
    %v511 = vpop.f32.mrf.mxu0
    %v512 = vadd.f32 %v101, %v511
    %513 = vmatprep.mubr.f32.mxu0 0.0
    %514 = vmatmul.mubr.f32.gmra.mxu0 %v183
    %v515 = vpop.f32.mrf.mxu0
    %v516 = vadd.f32 %v106, %v515
    %v517 = vpop.f32.mrf.mxu0
    %v518 = vadd.f32 %v106, %v517
    %519 = vmatprep.mubr.f32.mxu0 0.0
    %520 = vmatmul.mubr.f32.gmra.mxu0 %v185
    %v521 = vpop.f32.mrf.mxu0
    %v522 = vadd.f32 %v111, %v521
    %v523 = vpop.f32.mrf.mxu0
    %v524 = vadd.f32 %v111, %v523
    %525 = vmatprep.mubr.f32.mxu0 0.0
    %526 = vmatmul.mubr.f32.gmra.mxu0 %v187
    %v527 = vpop.f32.mrf.mxu0
    %v528 = vadd.f32 %v116, %v527
    %v529 = vpop.f32.mrf.mxu0
    %v530 = vadd.f32 %v116, %v529
    %531 = vmatprep.mubr.f32.mxu0 0.0
    %532 = vmatmul.mubr.f32.gmra.mxu0 %v189
    %v533 = vpop.f32.mrf.mxu0
    %v534 = vadd.f32 %v121, %v533
    %v535 = vpop.f32.mrf.mxu0
    %v536 = vadd.f32 %v121, %v535
    %537 = vmatprep.mubr.f32.mxu0 0.0
    %538 = vmatmul.mubr.f32.gmra.mxu0 %v191
    %v539 = vpop.f32.mrf.mxu0
    %v540 = vadd.f32 %v126, %v539
    %v541 = vpop.f32.mrf.mxu0
    %v542 = vadd.f32 %v126, %v541
    %543 = vmatprep.mubr.f32.mxu0 0.0
    %544 = vmatmul.mubr.f32.gmra.mxu0 %v193
    %v545 = vpop.f32.mrf.mxu0
    %v546 = vadd.f32 %v131, %v545
    %v547 = vpop.f32.mrf.mxu0
    %v548 = vadd.f32 %v131, %v547
    %549 = vmatprep.mubr.f32.mxu0 0.0
    %550 = vmatmul.mubr.f32.gmra.mxu0 %v195
    %v551 = vpop.f32.mrf.mxu0
    %v552 = vadd.f32 %v136, %v551
    %v553 = vpop.f32.mrf.mxu0
    %v554 = vadd.f32 %v136, %v553
    %555 = vmatprep.mubr.f32.mxu0 0.0
    %556 = vmatmul.mubr.f32.gmra.mxu0 %v197
    %v557 = vpop.f32.mrf.mxu0
    %v558 = vadd.f32 %v141, %v557
    %v559 = vpop.f32.mrf.mxu0
    %v560 = vadd.f32 %v141, %v559
    %561 = vmatprep.mubr.f32.mxu0 0.0
    %562 = vmatmul.mubr.f32.gmra.mxu0 %v199
    %v563 = vpop.f32.mrf.mxu0
    %v564 = vadd.f32 %v146, %v563
    %v565 = vpop.f32.mrf.mxu0
    %v566 = vadd.f32 %v146, %v565
    %567 = vmatprep.mubr.f32.mxu0 0.0
    %568 = vmatmul.mubr.f32.gmra.mxu0 %v201
    %v569 = vpop.f32.mrf.mxu0
    %v570 = vadd.f32 %v151, %v569
    %v571 = vpop.f32.mrf.mxu0
    %v572 = vadd.f32 %v151, %v571
    %573 = vmatprep.mubr.f32.mxu0 0.0
    %574 = vmatmul.mubr.f32.gmra.mxu0 %v203
    %v575 = vpop.f32.mrf.mxu0
    %v576 = vadd.f32 %v156, %v575
    %v577 = vpop.f32.mrf.mxu0
    %v578 = vadd.f32 %v156, %v577
    %579 = vmatprep.mubr.f32.mxu0 0.0
    %580 = vmatmul.mubr.f32.gmra.mxu0 %v205
    %v581 = vpop.f32.mrf.mxu0
    %v582 = vadd.f32 %v161, %v581
    %v583 = vpop.f32.mrf.mxu0
    %v584 = vadd.f32 %v161, %v583
    %585 = vmatprep.mubr.f32.mxu0 0.0
    %586 = vmatmul.mubr.f32.gmra.mxu0 %v207
    %v587 = vpop.f32.mrf.mxu0
    %v588 = vadd.f32 %v166, %v587
    %v589 = vpop.f32.mrf.mxu0
    %v590 = vadd.f32 %v166, %v589
    %591 = vdwg.mxu0
    %v592 = vlaneseq
    %v593 = vand.u32 %v592, 127
    %v594 = vadd.s32 %v593, 128
    %v595 = vadd.s32 %v593, 256
    %v596 = vadd.s32 %v593, 384
    %vm597 = vcmp.lt.s32.totalorder %v593, 0
    %v598 = vsub.s32 0, %v593
    %v599 = vsel %vm597, %v598, %v593
    %v600 = vshrl.u32 %v599, 8
    %v601 = vand.u32 %v599, 255
    %v602 = vsub.s32 0, %v601
    %v603 = vsel %vm597, %v602, %v601
    %vm604 = vcmp.lt.s32.totalorder %v594, 0
    %v605 = vsub.s32 0, %v594
    %v606 = vsel %vm604, %v605, %v594
    %v607 = vshrl.u32 %v606, 8
    %v608 = vand.u32 %v606, 255
    %v609 = vsub.s32 0, %v608
    %v610 = vsel %vm604, %v609, %v608
    %vm611 = vcmp.lt.s32.totalorder %v595, 0
    %v612 = vsub.s32 0, %v595
    %v613 = vsel %vm611, %v612, %v595
    %v614 = vshrl.u32 %v613, 8
    %v615 = vand.u32 %v613, 255
    %v616 = vsub.s32 0, %v615
    %v617 = vsel %vm611, %v616, %v615
    %vm618 = vcmp.lt.s32.totalorder %v596, 0
    %v619 = vsub.s32 0, %v596
    %v620 = vsel %vm618, %v619, %v596
    %v621 = vshrl.u32 %v620, 8
    %v622 = vand.u32 %v620, 255
    %v623 = vsub.s32 0, %v622
    %v624 = vsel %vm618, %v623, %v622
    %vm625 = vcmp.ne.s32.totalorder %v603, 0
    %vm626 = vcmp.ne.s32.totalorder %v610, 0
    %vm627 = vcmp.ne.s32.totalorder %v617, 0
    %vm628 = vcmp.ne.s32.totalorder %v624, 0
    %vm629 = vcmp.lt.s32.totalorder %v603, 0
    %vm630 = vcmp.lt.s32.totalorder %v610, 0
    %vm631 = vcmp.lt.s32.totalorder %v617, 0
    %vm632 = vcmp.lt.s32.totalorder %v624, 0
    %vm633 = vmand %vm629, %vm625
    %vm634 = vmand %vm630, %vm626
    %vm635 = vmand %vm631, %vm627
    %vm636 = vmand %vm632, %vm628
    %v637 = vadd.s32 %v603, 256
    %v638 = vadd.s32 %v610, 256
    %v639 = vadd.s32 %v617, 256
    %v640 = vadd.s32 %v624, 256
    %v641 = vsel %vm633, %v637, %v603
    %v642 = vsel %vm634, %v638, %v610
    %v643 = vsel %vm635, %v639, %v617
    %v644 = vsel %vm636, %v640, %v624
    %vm645 = vcmp.ge.s32.totalorder %v641, 1
    %vm646 = vcmp.ge.s32.totalorder %v642, 1
    %vm647 = vcmp.ge.s32.totalorder %v643, 1
    %vm648 = vcmp.ge.s32.totalorder %v644, 1
    %649 = vrot.lane.b32.xlu0 %v289, 1
    %v650 = vpop.permute.xlu0 %649
    %651 = vrot.lane.b32.xlu0 %v295, 1
    %v652 = vpop.permute.xlu0 %651
    %653 = vrot.lane.b32.xlu0 %v301, 1
    %v654 = vpop.permute.xlu0 %653
    %655 = vrot.lane.b32.xlu0 %v307, 1
    %v656 = vpop.permute.xlu0 %655
    %657 = vrot.lane.b32.xlu0 %v291, 1
    %v658 = vpop.permute.xlu0 %657
    %659 = vrot.lane.b32.xlu0 %v297, 1
    %v660 = vpop.permute.xlu0 %659
    %661 = vrot.lane.b32.xlu0 %v303, 1
    %v662 = vpop.permute.xlu0 %661
    %663 = vrot.lane.b32.xlu0 %v309, 1
    %v664 = vpop.permute.xlu0 %663
    %665 = vrot.lane.b32.xlu0 %v474, 1
    %v666 = vpop.permute.xlu0 %665
    %667 = vrot.lane.b32.xlu0 %v480, 1
    %v668 = vpop.permute.xlu0 %667
    %669 = vrot.lane.b32.xlu0 %v486, 1
    %v670 = vpop.permute.xlu0 %669
    %671 = vrot.lane.b32.xlu0 %v492, 1
    %v672 = vpop.permute.xlu0 %671
    %673 = vrot.lane.b32.xlu0 %v476, 1
    %v674 = vpop.permute.xlu0 %673
    %675 = vrot.lane.b32.xlu0 %v482, 1
    %v676 = vpop.permute.xlu0 %675
    %677 = vrot.lane.b32.xlu0 %v488, 1
    %v678 = vpop.permute.xlu0 %677
    %679 = vrot.lane.b32.xlu0 %v494, 1
    %v680 = vpop.permute.xlu0 %679
    %vm681 = vcmp.lt.s32.totalorder %v593, 1
    %v682 = vsel %vm681, %v666, %v674
    %v683 = vsel %vm681, %v668, %v676
    %v684 = vsel %vm681, %v670, %v678
    %v685 = vsel %vm681, %v672, %v680
    %v686 = vsel %vm681, %v658, %v666
    %v687 = vsel %vm681, %v660, %v668
    %v688 = vsel %vm681, %v662, %v670
    %v689 = vsel %vm681, %v664, %v672
    %v690 = vsel %vm681, %v650, %v658
    %v691 = vsel %vm681, %v652, %v660
    %v692 = vsel %vm681, %v654, %v662
    %v693 = vsel %vm681, %v656, %v664
    %v694 = vsel %vm681, %v674, %v650
    %v695 = vsel %vm681, %v676, %v652
    %v696 = vsel %vm681, %v678, %v654
    %v697 = vsel %vm681, %v680, %v656
    %v698 = vsel %vm645, %v694, 0.0
    %v699 = vsel %vm646, %v690, 0.0
    %v700 = vsel %vm647, %v686, 0.0
    %v701 = vsel %vm648, %v682, 0.0
    %v702 = vsel %vm645, %v695, 0.0
    %v703 = vsel %vm646, %v691, 0.0
    %v704 = vsel %vm647, %v687, 0.0
    %v705 = vsel %vm648, %v683, 0.0
    %v706 = vsel %vm645, %v696, 0.0
    %v707 = vsel %vm646, %v692, 0.0
    %v708 = vsel %vm647, %v688, 0.0
    %v709 = vsel %vm648, %v684, 0.0
    %v710 = vsel %vm645, %v697, 0.0
    %v711 = vsel %vm646, %v693, 0.0
    %v712 = vsel %vm647, %v689, 0.0
    %v713 = vsel %vm648, %v685, 0.0
    %vm714 = vcmp.lt.s32.totalorder %v641, 255
    %vm715 = vcmp.lt.s32.totalorder %v642, 255
    %vm716 = vcmp.lt.s32.totalorder %v643, 255
    %vm717 = vcmp.lt.s32.totalorder %v644, 255
    %718 = vrot.lane.b32.xlu0 %v289, 127
    %v719 = vpop.permute.xlu0 %718
    %720 = vrot.lane.b32.xlu0 %v295, 127
    %v721 = vpop.permute.xlu0 %720
    %722 = vrot.lane.b32.xlu0 %v301, 127
    %v723 = vpop.permute.xlu0 %722
    %724 = vrot.lane.b32.xlu0 %v307, 127
    %v725 = vpop.permute.xlu0 %724
    %726 = vrot.lane.b32.xlu0 %v291, 127
    %v727 = vpop.permute.xlu0 %726
    %728 = vrot.lane.b32.xlu0 %v297, 127
    %v729 = vpop.permute.xlu0 %728
    %730 = vrot.lane.b32.xlu0 %v303, 127
    %v731 = vpop.permute.xlu0 %730
    %732 = vrot.lane.b32.xlu0 %v309, 127
    %v733 = vpop.permute.xlu0 %732
    %734 = vrot.lane.b32.xlu0 %v474, 127
    %v735 = vpop.permute.xlu0 %734
    %736 = vrot.lane.b32.xlu0 %v480, 127
    %v737 = vpop.permute.xlu0 %736
    %738 = vrot.lane.b32.xlu0 %v486, 127
    %v739 = vpop.permute.xlu0 %738
    %740 = vrot.lane.b32.xlu0 %v492, 127
    %v741 = vpop.permute.xlu0 %740
    %742 = vrot.lane.b32.xlu0 %v476, 127
    %v743 = vpop.permute.xlu0 %742
    %744 = vrot.lane.b32.xlu0 %v482, 127
    %v745 = vpop.permute.xlu0 %744
    %746 = vrot.lane.b32.xlu0 %v488, 127
    %v747 = vpop.permute.xlu0 %746
    %748 = vrot.lane.b32.xlu0 %v494, 127
    %v749 = vpop.permute.xlu0 %748
    %vm750 = vcmp.lt.s32.totalorder %v593, 127
    %v751 = vsel %vm750, %v735, %v743
    %v752 = vsel %vm750, %v737, %v745
    %v753 = vsel %vm750, %v739, %v747
    %v754 = vsel %vm750, %v741, %v749
    %v755 = vsel %vm750, %v727, %v735
    %v756 = vsel %vm750, %v729, %v737
    %v757 = vsel %vm750, %v731, %v739
    %v758 = vsel %vm750, %v733, %v741
    %v759 = vsel %vm750, %v719, %v727
    %v760 = vsel %vm750, %v721, %v729
    %v761 = vsel %vm750, %v723, %v731
    %v762 = vsel %vm750, %v725, %v733
    %v763 = vsel %vm750, %v743, %v719
    %v764 = vsel %vm750, %v745, %v721
    %v765 = vsel %vm750, %v747, %v723
    %v766 = vsel %vm750, %v749, %v725
    %v767 = vsel %vm714, %v759, 0.0
    %v768 = vsel %vm715, %v755, 0.0
    %v769 = vsel %vm716, %v751, 0.0
    %v770 = vsel %vm717, %v763, 0.0
    %v771 = vsel %vm714, %v760, 0.0
    %v772 = vsel %vm715, %v756, 0.0
    %v773 = vsel %vm716, %v752, 0.0
    %v774 = vsel %vm717, %v764, 0.0
    %v775 = vsel %vm714, %v761, 0.0
    %v776 = vsel %vm715, %v757, 0.0
    %v777 = vsel %vm716, %v753, 0.0
    %v778 = vsel %vm717, %v765, 0.0
    %v779 = vsel %vm714, %v762, 0.0
    %v780 = vsel %vm715, %v758, 0.0
    %v781 = vsel %vm716, %v754, 0.0
    %v782 = vsel %vm717, %v766, 0.0
    %v783 = vld [vmem:[#allocation5 + $0xa0] sm:$0xff]
    %v784 = vld [vmem:[#allocation5 + $0xa8] sm:$0xff]
    %v785 = vld [vmem:[#allocation5 + $0xb0] sm:$0xff]
    %v786 = vld [vmem:[#allocation5 + $0xb8] sm:$0xff]
    %v787 = vld [vmem:[#allocation5 + $0xc0] sm:$0xff]
    %v788 = vld [vmem:[#allocation5 + $0xc8] sm:$0xff]
    %v789 = vld [vmem:[#allocation5 + $0xd0] sm:$0xff]
    %v790 = vld [vmem:[#allocation5 + $0xd8] sm:$0xff]
    %792 = vset.pattern.permute.xlu0 127
    %793 = vperm.xlu0 %792, %v783
    %v794 = vpop.permute.xlu0 %793
    %797 = vset.pattern.permute.xlu0 127
    %798 = vperm.xlu0 %797, %v784
    %v799 = vpop.permute.xlu0 %798
    %802 = vset.pattern.permute.xlu0 127
    %803 = vperm.xlu0 %802, %v785
    %v804 = vpop.permute.xlu0 %803
    %807 = vset.pattern.permute.xlu0 127
    %808 = vperm.xlu0 %807, %v786
    %v809 = vpop.permute.xlu0 %808
    %812 = vset.pattern.permute.xlu0 127
    %813 = vperm.xlu0 %812, %v787
    %v814 = vpop.permute.xlu0 %813
    %817 = vset.pattern.permute.xlu0 127
    %818 = vperm.xlu0 %817, %v788
    %v819 = vpop.permute.xlu0 %818
    %822 = vset.pattern.permute.xlu0 127
    %823 = vperm.xlu0 %822, %v789
    %v824 = vpop.permute.xlu0 %823
    %827 = vset.pattern.permute.xlu0 127
    %828 = vperm.xlu0 %827, %v790
    %v829 = vpop.permute.xlu0 %828
    %vm831 = vcmask 785408
    %v832 = vsel %vm831, %v783, 0
    %v834 = vsel %vm831, %v784, 0
    %v836 = vsel %vm831, %v785, 0
    %v838 = vsel %vm831, %v786, 0
    %v840 = vsel %vm831, %v787, 0
    %v842 = vsel %vm831, %v788, 0
    %v844 = vsel %vm831, %v789, 0
    %v846 = vsel %vm831, %v790, 0
    %848 = vmatprep.subr.mxu0 0.0
    %849 = vmatpush1.msra.mxu0 0.0
    %850 = vmatprep.subr.mxu0 0.0
    %851 = vmatpush1.msra.mxu0 0.0
    %852 = vmatprep.subr.mxu0 0.0
    %853 = vmatpush1.msra.mxu0 0.0
    %854 = vmatprep.subr.mxu0 0.0
    %855 = vmatpush1.msra.mxu0 0.0
    %856 = vmatprep.subr.mxu0 %v780
    %857 = vmatpush1.msra.mxu0 %v779
    %858 = vmatprep.subr.mxu0 %v776
    %859 = vmatpush1.msra.mxu0 %v775
    %860 = vmatprep.subr.mxu0 %v772
    %861 = vmatpush1.msra.mxu0 %v771
    %862 = vmatprep.subr.mxu0 %v768
    %863 = vmatpush1.msra.mxu0 %v767
    %864 = vmatprep.subr.mxu0 %v309
    %865 = vmatpush1.msra.mxu0 %v307
    %866 = vmatprep.subr.mxu0 %v303
    %867 = vmatpush1.msra.mxu0 %v301
    %868 = vmatprep.subr.mxu0 %v297
    %869 = vmatpush1.msra.mxu0 %v295
    %870 = vmatprep.subr.mxu0 %v291
    %871 = vmatpush1.msra.mxu0 %v289
    %872 = vmatprep.subr.mxu0 %v711
    %873 = vmatpush1.msra.mxu0 %v710
    %874 = vmatprep.subr.mxu0 %v707
    %875 = vmatpush1.msra.mxu0 %v706
    %876 = vmatprep.subr.mxu0 %v703
    %877 = vmatpush1.msra.mxu0 %v702
    %878 = vmatprep.subr.mxu0 %v699
    %879 = vmatpush1.msra.mxu0 %v698
    %880 = vmatprep.subr.mxu0 0.0
    %881 = vmatpush2.msra.mxu0 0.0
    %882 = vmatprep.subr.mxu0 0.0
    %883 = vmatpush2.msra.mxu0 0.0
    %884 = vmatprep.subr.mxu0 0.0
    %885 = vmatpush2.msra.mxu0 0.0
    %886 = vmatprep.subr.mxu0 0.0
    %887 = vmatpush2.msra.mxu0 0.0
    %888 = vmatprep.subr.mxu0 0.0
    %889 = vmatpush2.msra.mxu0 0.0
    %890 = vmatprep.subr.mxu0 0.0
    %891 = vmatpush2.msra.mxu0 0.0
    %892 = vmatprep.subr.mxu0 0.0
    %893 = vmatpush2.msra.mxu0 0.0
    %894 = vmatprep.subr.mxu0 0.0
    %895 = vmatpush2.msra.mxu0 0.0
    %896 = vmatprep.subr.mxu0 0.0
    %897 = vmatpush2.msra.mxu0 0.0
    %898 = vmatprep.subr.mxu0 0.0
    %899 = vmatpush2.msra.mxu0 0.0
    %900 = vmatprep.subr.mxu0 0.0
    %901 = vmatpush2.msra.mxu0 0.0
    %902 = vmatprep.subr.mxu0 0.0
    %903 = vmatpush2.msra.mxu0 0.0
    %904 = vmatprep.subr.mxu0 0.0
    %905 = vmatpush2.msra.mxu0 0.0
    %906 = vmatprep.subr.mxu0 0.0
    %907 = vmatpush2.msra.mxu0 0.0
    %908 = vmatprep.subr.mxu0 0.0
    %909 = vmatpush2.msra.mxu0 0.0
    %910 = vmatprep.subr.mxu0 0.0
    %911 = vmatpush2.msra.mxu0 0.0
    %912 = vmatprep.mubr.f32.mxu0 0.0
    %913 = vmatmul.mubr.f32.gmra.mxu0 %v832
    %v914 = vpop.f32.mrf.mxu0
    %v915 = vadd.f32 %v794, %v914
    %v916 = vpop.f32.mrf.mxu0
    %v917 = vadd.f32 %v794, %v916
    %918 = vmatprep.mubr.f32.mxu0 0.0
    %919 = vmatmul.mubr.f32.gmra.mxu0 %v834
    %v920 = vpop.f32.mrf.mxu0
    %v921 = vadd.f32 %v799, %v920
    %v922 = vpop.f32.mrf.mxu0
    %v923 = vadd.f32 %v799, %v922
    %924 = vmatprep.mubr.f32.mxu0 0.0
    %925 = vmatmul.mubr.f32.gmra.mxu0 %v836
    %v926 = vpop.f32.mrf.mxu0
    %v927 = vadd.f32 %v804, %v926
    %v928 = vpop.f32.mrf.mxu0
    %v929 = vadd.f32 %v804, %v928
    %930 = vmatprep.mubr.f32.mxu0 0.0
    %931 = vmatmul.mubr.f32.gmra.mxu0 %v838
    %v932 = vpop.f32.mrf.mxu0
    %v933 = vadd.f32 %v809, %v932
    %v934 = vpop.f32.mrf.mxu0
    %v935 = vadd.f32 %v809, %v934
    %936 = vmatprep.mubr.f32.mxu0 0.0
    %937 = vmatmul.mubr.f32.gmra.mxu0 %v840
    %v938 = vpop.f32.mrf.mxu0
    %v939 = vadd.f32 %v814, %v938
    %v940 = vpop.f32.mrf.mxu0
    %v941 = vadd.f32 %v814, %v940
    %942 = vmatprep.mubr.f32.mxu0 0.0
    %943 = vmatmul.mubr.f32.gmra.mxu0 %v842
    %v944 = vpop.f32.mrf.mxu0
    %v945 = vadd.f32 %v819, %v944
    %v946 = vpop.f32.mrf.mxu0
    %v947 = vadd.f32 %v819, %v946
    %948 = vmatprep.mubr.f32.mxu0 0.0
    %949 = vmatmul.mubr.f32.gmra.mxu0 %v844
    %v950 = vpop.f32.mrf.mxu0
    %v951 = vadd.f32 %v824, %v950
    %v952 = vpop.f32.mrf.mxu0
    %v953 = vadd.f32 %v824, %v952
    %954 = vmatprep.mubr.f32.mxu0 0.0
    %955 = vmatmul.mubr.f32.gmra.mxu0 %v846
    %v956 = vpop.f32.mrf.mxu0
    %v957 = vadd.f32 %v829, %v956
    %v958 = vpop.f32.mrf.mxu0
    %v959 = vadd.f32 %v829, %v958
    %960 = vdwg.mxu0
    %961 = vmatprep.subr.mxu0 0.0
    %962 = vmatpush1.msra.mxu0 0.0
    %963 = vmatprep.subr.mxu0 0.0
    %964 = vmatpush1.msra.mxu0 0.0
    %965 = vmatprep.subr.mxu0 0.0
    %966 = vmatpush1.msra.mxu0 0.0
    %967 = vmatprep.subr.mxu0 0.0
    %968 = vmatpush1.msra.mxu0 0.0
    %969 = vmatprep.subr.mxu0 %v782
    %970 = vmatpush1.msra.mxu0 %v781
    %971 = vmatprep.subr.mxu0 %v778
    %972 = vmatpush1.msra.mxu0 %v777
    %973 = vmatprep.subr.mxu0 %v774
    %974 = vmatpush1.msra.mxu0 %v773
    %975 = vmatprep.subr.mxu0 %v770
    %976 = vmatpush1.msra.mxu0 %v769
    %977 = vmatprep.subr.mxu0 %v494
    %978 = vmatpush1.msra.mxu0 %v492
    %979 = vmatprep.subr.mxu0 %v488
    %980 = vmatpush1.msra.mxu0 %v486
    %981 = vmatprep.subr.mxu0 %v482
    %982 = vmatpush1.msra.mxu0 %v480
    %983 = vmatprep.subr.mxu0 %v476
    %984 = vmatpush1.msra.mxu0 %v474
    %985 = vmatprep.subr.mxu0 %v713
    %986 = vmatpush1.msra.mxu0 %v712
    %987 = vmatprep.subr.mxu0 %v709
    %988 = vmatpush1.msra.mxu0 %v708
    %989 = vmatprep.subr.mxu0 %v705
    %990 = vmatpush1.msra.mxu0 %v704
    %991 = vmatprep.subr.mxu0 %v701
    %992 = vmatpush1.msra.mxu0 %v700
    %993 = vmatprep.subr.mxu0 0.0
    %994 = vmatpush2.msra.mxu0 0.0
    %995 = vmatprep.subr.mxu0 0.0
    %996 = vmatpush2.msra.mxu0 0.0
    %997 = vmatprep.subr.mxu0 0.0
    %998 = vmatpush2.msra.mxu0 0.0
    %999 = vmatprep.subr.mxu0 0.0
    %1000 = vmatpush2.msra.mxu0 0.0
    %1001 = vmatprep.subr.mxu0 0.0
    %1002 = vmatpush2.msra.mxu0 0.0
    %1003 = vmatprep.subr.mxu0 0.0
    %1004 = vmatpush2.msra.mxu0 0.0
    %1005 = vmatprep.subr.mxu0 0.0
    %1006 = vmatpush2.msra.mxu0 0.0
    %1007 = vmatprep.subr.mxu0 0.0
    %1008 = vmatpush2.msra.mxu0 0.0
    %1009 = vmatprep.subr.mxu0 0.0
    %1010 = vmatpush2.msra.mxu0 0.0
    %1011 = vmatprep.subr.mxu0 0.0
    %1012 = vmatpush2.msra.mxu0 0.0
    %1013 = vmatprep.subr.mxu0 0.0
    %1014 = vmatpush2.msra.mxu0 0.0
    %1015 = vmatprep.subr.mxu0 0.0
    %1016 = vmatpush2.msra.mxu0 0.0
    %1017 = vmatprep.subr.mxu0 0.0
    %1018 = vmatpush2.msra.mxu0 0.0
    %1019 = vmatprep.subr.mxu0 0.0
    %1020 = vmatpush2.msra.mxu0 0.0
    %1021 = vmatprep.subr.mxu0 0.0
    %1022 = vmatpush2.msra.mxu0 0.0
    %1023 = vmatprep.subr.mxu0 0.0
    %1024 = vmatpush2.msra.mxu0 0.0
    %1025 = vmatprep.mubr.f32.mxu0 0.0
    %1026 = vmatmul.mubr.f32.gmra.mxu0 %v832
    %v1027 = vpop.f32.mrf.mxu0
    %v1028 = vadd.f32 %v794, %v1027
    %v1029 = vpop.f32.mrf.mxu0
    %v1030 = vadd.f32 %v794, %v1029
    %1031 = vmatprep.mubr.f32.mxu0 0.0
    %1032 = vmatmul.mubr.f32.gmra.mxu0 %v834
    %v1033 = vpop.f32.mrf.mxu0
    %v1034 = vadd.f32 %v799, %v1033
    %v1035 = vpop.f32.mrf.mxu0
    %v1036 = vadd.f32 %v799, %v1035
    %1037 = vmatprep.mubr.f32.mxu0 0.0
    %1038 = vmatmul.mubr.f32.gmra.mxu0 %v836
    %v1039 = vpop.f32.mrf.mxu0
    %v1040 = vadd.f32 %v804, %v1039
    %v1041 = vpop.f32.mrf.mxu0
    %v1042 = vadd.f32 %v804, %v1041
    %1043 = vmatprep.mubr.f32.mxu0 0.0
    %1044 = vmatmul.mubr.f32.gmra.mxu0 %v838
    %v1045 = vpop.f32.mrf.mxu0
    %v1046 = vadd.f32 %v809, %v1045
    %v1047 = vpop.f32.mrf.mxu0
    %v1048 = vadd.f32 %v809, %v1047
    %1049 = vmatprep.mubr.f32.mxu0 0.0
    %1050 = vmatmul.mubr.f32.gmra.mxu0 %v840
    %v1051 = vpop.f32.mrf.mxu0
    %v1052 = vadd.f32 %v814, %v1051
    %v1053 = vpop.f32.mrf.mxu0
    %v1054 = vadd.f32 %v814, %v1053
    %1055 = vmatprep.mubr.f32.mxu0 0.0
    %1056 = vmatmul.mubr.f32.gmra.mxu0 %v842
    %v1057 = vpop.f32.mrf.mxu0
    %v1058 = vadd.f32 %v819, %v1057
    %v1059 = vpop.f32.mrf.mxu0
    %v1060 = vadd.f32 %v819, %v1059
    %1061 = vmatprep.mubr.f32.mxu0 0.0
    %1062 = vmatmul.mubr.f32.gmra.mxu0 %v844
    %v1063 = vpop.f32.mrf.mxu0
    %v1064 = vadd.f32 %v824, %v1063
    %v1065 = vpop.f32.mrf.mxu0
    %v1066 = vadd.f32 %v824, %v1065
    %1067 = vmatprep.mubr.f32.mxu0 0.0
    %1068 = vmatmul.mubr.f32.gmra.mxu0 %v846
    %v1069 = vpop.f32.mrf.mxu0
    %v1070 = vadd.f32 %v829, %v1069
    %v1071 = vpop.f32.mrf.mxu0
    %v1072 = vadd.f32 %v829, %v1071
    %1073 = vdwg.mxu0
    %v1074 = vadd.f32 %v915, %v313
    %v1075 = vadd.f32 %v917, %v315
    %v1076 = vadd.f32 %v1028, %v498
    %v1077 = vadd.f32 %v1030, %v500
    %v1078 = vadd.f32 %v921, %v319
    %v1079 = vadd.f32 %v923, %v321
    %v1080 = vadd.f32 %v1034, %v504
    %v1081 = vadd.f32 %v1036, %v506
    %v1082 = vadd.f32 %v927, %v325
    %v1083 = vadd.f32 %v929, %v327
    %v1084 = vadd.f32 %v1040, %v510
    %v1085 = vadd.f32 %v1042, %v512
    %v1086 = vadd.f32 %v933, %v331
    %v1087 = vadd.f32 %v935, %v333
    %v1088 = vadd.f32 %v1046, %v516
    %v1089 = vadd.f32 %v1048, %v518
    %v1090 = vadd.f32 %v939, %v337
    %v1091 = vadd.f32 %v941, %v339
    %v1092 = vadd.f32 %v1052, %v522
    %v1093 = vadd.f32 %v1054, %v524
    %v1094 = vadd.f32 %v945, %v343
    %v1095 = vadd.f32 %v947, %v345
    %v1096 = vadd.f32 %v1058, %v528
    %v1097 = vadd.f32 %v1060, %v530
    %v1098 = vadd.f32 %v951, %v349
    %v1099 = vadd.f32 %v953, %v351
    %v1100 = vadd.f32 %v1064, %v534
    %v1101 = vadd.f32 %v1066, %v536
    %v1102 = vadd.f32 %v957, %v355
    %v1103 = vadd.f32 %v959, %v357
    %v1104 = vadd.f32 %v1070, %v540
    %v1105 = vadd.f32 %v1072, %v542
    %v1106 = vtanh.pop %v1074
    %v1107 = vtanh.pop %v1075
    %v1108 = vtanh.pop %v1076
    %v1109 = vtanh.pop %v1077
    %v1110 = vtanh.pop %v1078
    %v1111 = vtanh.pop %v1079
    %v1112 = vtanh.pop %v1080
    %v1113 = vtanh.pop %v1081
    %v1114 = vtanh.pop %v1082
    %v1115 = vtanh.pop %v1083
    %v1116 = vtanh.pop %v1084
    %v1117 = vtanh.pop %v1085
    %v1118 = vtanh.pop %v1086
    %v1119 = vtanh.pop %v1087
    %v1120 = vtanh.pop %v1088
    %v1121 = vtanh.pop %v1089
    %v1122 = vxor.u32 %v1090, 2147483648
    %v1123 = vxor.u32 %v1091, 2147483648
    %v1124 = vxor.u32 %v1092, 2147483648
    %v1125 = vxor.u32 %v1093, 2147483648
    %v1126 = vxor.u32 %v1094, 2147483648
    %v1127 = vxor.u32 %v1095, 2147483648
    %v1128 = vxor.u32 %v1096, 2147483648
    %v1129 = vxor.u32 %v1097, 2147483648
    %v1130 = vxor.u32 %v1098, 2147483648
    %v1131 = vxor.u32 %v1099, 2147483648
    %v1132 = vxor.u32 %v1100, 2147483648
    %v1133 = vxor.u32 %v1101, 2147483648
    %v1134 = vxor.u32 %v1102, 2147483648
    %v1135 = vxor.u32 %v1103, 2147483648
    %v1136 = vxor.u32 %v1104, 2147483648
    %v1137 = vxor.u32 %v1105, 2147483648
    %v1138 = vmul.f32 %v1122, 1.442695
    %v1139 = vpow.pop %v1138
    %v1140 = vmul.f32 %v1123, 1.442695
    %v1141 = vpow.pop %v1140
    %v1142 = vmul.f32 %v1124, 1.442695
    %v1143 = vpow.pop %v1142
    %v1144 = vmul.f32 %v1125, 1.442695
    %v1145 = vpow.pop %v1144
    %v1146 = vmul.f32 %v1126, 1.442695
    %v1147 = vpow.pop %v1146
    %v1148 = vmul.f32 %v1127, 1.442695
    %v1149 = vpow.pop %v1148
    %v1150 = vmul.f32 %v1128, 1.442695
    %v1151 = vpow.pop %v1150
    %v1152 = vmul.f32 %v1129, 1.442695
    %v1153 = vpow.pop %v1152
    %v1154 = vmul.f32 %v1130, 1.442695
    %v1155 = vpow.pop %v1154
    %v1156 = vmul.f32 %v1131, 1.442695
    %v1157 = vpow.pop %v1156
    %v1158 = vmul.f32 %v1132, 1.442695
    %v1159 = vpow.pop %v1158
    %v1160 = vmul.f32 %v1133, 1.442695
    %v1161 = vpow.pop %v1160
    %v1162 = vmul.f32 %v1134, 1.442695
    %v1163 = vpow.pop %v1162
    %v1164 = vmul.f32 %v1135, 1.442695
    %v1165 = vpow.pop %v1164
    %v1166 = vmul.f32 %v1136, 1.442695
    %v1167 = vpow.pop %v1166
    %v1168 = vmul.f32 %v1137, 1.442695
    %v1169 = vpow.pop %v1168
    %v1170 = vadd.f32 %v1139, 1.0
    %v1171 = vadd.f32 %v1141, 1.0
    %v1172 = vadd.f32 %v1143, 1.0
    %v1173 = vadd.f32 %v1145, 1.0
    %v1174 = vadd.f32 %v1147, 1.0
    %v1175 = vadd.f32 %v1149, 1.0
    %v1176 = vadd.f32 %v1151, 1.0
    %v1177 = vadd.f32 %v1153, 1.0
    %v1178 = vadd.f32 %v1155, 1.0
    %v1179 = vadd.f32 %v1157, 1.0
    %v1180 = vadd.f32 %v1159, 1.0
    %v1181 = vadd.f32 %v1161, 1.0
    %v1182 = vadd.f32 %v1163, 1.0
    %v1183 = vadd.f32 %v1165, 1.0
    %v1184 = vadd.f32 %v1167, 1.0
    %v1185 = vadd.f32 %v1169, 1.0
    %v1186 = vrcp.pop %v1170
    %v1187 = vmul.f32 1.0, %v1186
    %v1188 = vrcp.pop %v1171
    %v1189 = vmul.f32 1.0, %v1188
    %v1190 = vrcp.pop %v1172
    %v1191 = vmul.f32 1.0, %v1190
    %v1192 = vrcp.pop %v1173
    %v1193 = vmul.f32 1.0, %v1192
    %v1194 = vrcp.pop %v1174
    %v1195 = vmul.f32 1.0, %v1194
    %v1196 = vrcp.pop %v1175
    %v1197 = vmul.f32 1.0, %v1196
    %v1198 = vrcp.pop %v1176
    %v1199 = vmul.f32 1.0, %v1198
    %v1200 = vrcp.pop %v1177
    %v1201 = vmul.f32 1.0, %v1200
    %v1202 = vrcp.pop %v1178
    %v1203 = vmul.f32 1.0, %v1202
    %v1204 = vrcp.pop %v1179
    %v1205 = vmul.f32 1.0, %v1204
    %v1206 = vrcp.pop %v1180
    %v1207 = vmul.f32 1.0, %v1206
    %v1208 = vrcp.pop %v1181
    %v1209 = vmul.f32 1.0, %v1208
    %v1210 = vrcp.pop %v1182
    %v1211 = vmul.f32 1.0, %v1210
    %v1212 = vrcp.pop %v1183
    %v1213 = vmul.f32 1.0, %v1212
    %v1214 = vrcp.pop %v1184
    %v1215 = vmul.f32 1.0, %v1214
    %v1216 = vrcp.pop %v1185
    %v1217 = vmul.f32 1.0, %v1216
    %v1218 = vmul.f32 %v1106, %v1187
    %v1219 = vmul.f32 %v1107, %v1189
    %v1220 = vmul.f32 %v1108, %v1191
    %v1221 = vmul.f32 %v1109, %v1193
    %v1222 = vmul.f32 %v1110, %v1195
    %v1223 = vmul.f32 %v1111, %v1197
    %v1224 = vmul.f32 %v1112, %v1199
    %v1225 = vmul.f32 %v1113, %v1201
    %v1226 = vmul.f32 %v1114, %v1203
    %v1227 = vmul.f32 %v1115, %v1205
    %v1228 = vmul.f32 %v1116, %v1207
    %v1229 = vmul.f32 %v1117, %v1209
    %v1230 = vmul.f32 %v1118, %v1211
    %v1231 = vmul.f32 %v1119, %v1213
    %v1232 = vmul.f32 %v1120, %v1215
    %v1233 = vmul.f32 %v1121, %v1217
    %v1234 = vld [vmem:[#allocation5 + $0x120] sm:$0xff]
    %v1235 = vld [vmem:[#allocation5 + $0x128] sm:$0xff]
    %v1236 = vld [vmem:[#allocation5 + $0x130] sm:$0xff]
    %v1237 = vld [vmem:[#allocation5 + $0x138] sm:$0xff]
    %v1238 = vld [vmem:[#allocation5 + $0x140] sm:$0xff]
    %v1239 = vld [vmem:[#allocation5 + $0x148] sm:$0xff]
    %v1240 = vld [vmem:[#allocation5 + $0x150] sm:$0xff]
    %v1241 = vld [vmem:[#allocation5 + $0x158] sm:$0xff]
    %1243 = vset.pattern.permute.xlu0 127
    %1244 = vperm.xlu0 %1243, %v1234
    %v1245 = vpop.permute.xlu0 %1244
    %1248 = vset.pattern.permute.xlu0 127
    %1249 = vperm.xlu0 %1248, %v1235
    %v1250 = vpop.permute.xlu0 %1249
    %1253 = vset.pattern.permute.xlu0 127
    %1254 = vperm.xlu0 %1253, %v1236
    %v1255 = vpop.permute.xlu0 %1254
    %1258 = vset.pattern.permute.xlu0 127
    %1259 = vperm.xlu0 %1258, %v1237
    %v1260 = vpop.permute.xlu0 %1259
    %1263 = vset.pattern.permute.xlu0 127
    %1264 = vperm.xlu0 %1263, %v1238
    %v1265 = vpop.permute.xlu0 %1264
    %1268 = vset.pattern.permute.xlu0 127
    %1269 = vperm.xlu0 %1268, %v1239
    %v1270 = vpop.permute.xlu0 %1269
    %1273 = vset.pattern.permute.xlu0 127
    %1274 = vperm.xlu0 %1273, %v1240
    %v1275 = vpop.permute.xlu0 %1274
    %1278 = vset.pattern.permute.xlu0 127
    %1279 = vperm.xlu0 %1278, %v1241
    %v1280 = vpop.permute.xlu0 %1279
    %vm1282 = vcmask 261120
    %v1283 = vsel %vm1282, %v1234, 0
    %v1285 = vsel %vm1282, %v1235, 0
    %v1287 = vsel %vm1282, %v1236, 0
    %v1289 = vsel %vm1282, %v1237, 0
    %v1291 = vsel %vm1282, %v1238, 0
    %v1293 = vsel %vm1282, %v1239, 0
    %v1295 = vsel %vm1282, %v1240, 0
    %v1297 = vsel %vm1282, %v1241, 0
    %1299 = vmatprep.subr.mxu0 0.0
    %1300 = vmatpush1.msra.mxu0 0.0
    %1301 = vmatprep.subr.mxu0 0.0
    %1302 = vmatpush1.msra.mxu0 0.0
    %1303 = vmatprep.subr.mxu0 0.0
    %1304 = vmatpush1.msra.mxu0 0.0
    %1305 = vmatprep.subr.mxu0 0.0
    %1306 = vmatpush1.msra.mxu0 0.0
    %1307 = vmatprep.subr.mxu0 0.0
    %1308 = vmatpush1.msra.mxu0 0.0
    %1309 = vmatprep.subr.mxu0 0.0
    %1310 = vmatpush1.msra.mxu0 0.0
    %1311 = vmatprep.subr.mxu0 0.0
    %1312 = vmatpush1.msra.mxu0 0.0
    %1313 = vmatprep.subr.mxu0 0.0
    %1314 = vmatpush1.msra.mxu0 0.0
    %1315 = vmatprep.subr.mxu0 0.0
    %1316 = vmatpush1.msra.mxu0 0.0
    %1317 = vmatprep.subr.mxu0 0.0
    %1318 = vmatpush1.msra.mxu0 0.0
    %1319 = vmatprep.subr.mxu0 0.0
    %1320 = vmatpush1.msra.mxu0 0.0
    %1321 = vmatprep.subr.mxu0 0.0
    %1322 = vmatpush1.msra.mxu0 0.0
    %1323 = vmatprep.subr.mxu0 %v1231
    %1324 = vmatpush1.msra.mxu0 %v1230
    %1325 = vmatprep.subr.mxu0 %v1227
    %1326 = vmatpush1.msra.mxu0 %v1226
    %1327 = vmatprep.subr.mxu0 %v1223
    %1328 = vmatpush1.msra.mxu0 %v1222
    %1329 = vmatprep.subr.mxu0 %v1219
    %1330 = vmatpush1.msra.mxu0 %v1218
    %1331 = vmatprep.subr.mxu0 0.0
    %1332 = vmatpush2.msra.mxu0 0.0
    %1333 = vmatprep.subr.mxu0 0.0
    %1334 = vmatpush2.msra.mxu0 0.0
    %1335 = vmatprep.subr.mxu0 0.0
    %1336 = vmatpush2.msra.mxu0 0.0
    %1337 = vmatprep.subr.mxu0 0.0
    %1338 = vmatpush2.msra.mxu0 0.0
    %1339 = vmatprep.subr.mxu0 0.0
    %1340 = vmatpush2.msra.mxu0 0.0
    %1341 = vmatprep.subr.mxu0 0.0
    %1342 = vmatpush2.msra.mxu0 0.0
    %1343 = vmatprep.subr.mxu0 0.0
    %1344 = vmatpush2.msra.mxu0 0.0
    %1345 = vmatprep.subr.mxu0 0.0
    %1346 = vmatpush2.msra.mxu0 0.0
    %1347 = vmatprep.subr.mxu0 0.0
    %1348 = vmatpush2.msra.mxu0 0.0
    %1349 = vmatprep.subr.mxu0 0.0
    %1350 = vmatpush2.msra.mxu0 0.0
    %1351 = vmatprep.subr.mxu0 0.0
    %1352 = vmatpush2.msra.mxu0 0.0
    %1353 = vmatprep.subr.mxu0 0.0
    %1354 = vmatpush2.msra.mxu0 0.0
    %1355 = vmatprep.subr.mxu0 0.0
    %1356 = vmatpush2.msra.mxu0 0.0
    %1357 = vmatprep.subr.mxu0 0.0
    %1358 = vmatpush2.msra.mxu0 0.0
    %1359 = vmatprep.subr.mxu0 0.0
    %1360 = vmatpush2.msra.mxu0 0.0
    %1361 = vmatprep.subr.mxu0 0.0
    %1362 = vmatpush2.msra.mxu0 0.0
    %1363 = vmatprep.mubr.f32.mxu0 0.0
    %1364 = vmatmul.mubr.f32.gmra.mxu0 %v1283
    %v1365 = vpop.f32.mrf.mxu0
    %v1366 = vadd.f32 %v1245, %v1365
    %v1367 = vpop.f32.mrf.mxu0
    %v1368 = vadd.f32 %v1245, %v1367
    %1369 = vmatprep.mubr.f32.mxu0 0.0
    %1370 = vmatmul.mubr.f32.gmra.mxu0 %v1285
    %v1371 = vpop.f32.mrf.mxu0
    %v1372 = vadd.f32 %v1250, %v1371
    %v1373 = vpop.f32.mrf.mxu0
    %v1374 = vadd.f32 %v1250, %v1373
    %1375 = vmatprep.mubr.f32.mxu0 0.0
    %1376 = vmatmul.mubr.f32.gmra.mxu0 %v1287
    %v1377 = vpop.f32.mrf.mxu0
    %v1378 = vadd.f32 %v1255, %v1377
    %v1379 = vpop.f32.mrf.mxu0
    %v1380 = vadd.f32 %v1255, %v1379
    %1381 = vmatprep.mubr.f32.mxu0 0.0
    %1382 = vmatmul.mubr.f32.gmra.mxu0 %v1289
    %v1383 = vpop.f32.mrf.mxu0
    %v1384 = vadd.f32 %v1260, %v1383
    %v1385 = vpop.f32.mrf.mxu0
    %v1386 = vadd.f32 %v1260, %v1385
    %1387 = vmatprep.mubr.f32.mxu0 0.0
    %1388 = vmatmul.mubr.f32.gmra.mxu0 %v1291
    %v1389 = vpop.f32.mrf.mxu0
    %v1390 = vadd.f32 %v1265, %v1389
    %v1391 = vpop.f32.mrf.mxu0
    %v1392 = vadd.f32 %v1265, %v1391
    %1393 = vmatprep.mubr.f32.mxu0 0.0
    %1394 = vmatmul.mubr.f32.gmra.mxu0 %v1293
    %v1395 = vpop.f32.mrf.mxu0
    %v1396 = vadd.f32 %v1270, %v1395
    %v1397 = vpop.f32.mrf.mxu0
    %v1398 = vadd.f32 %v1270, %v1397
    %1399 = vmatprep.mubr.f32.mxu0 0.0
    %1400 = vmatmul.mubr.f32.gmra.mxu0 %v1295
    %v1401 = vpop.f32.mrf.mxu0
    %v1402 = vadd.f32 %v1275, %v1401
    %v1403 = vpop.f32.mrf.mxu0
    %v1404 = vadd.f32 %v1275, %v1403
    %1405 = vmatprep.mubr.f32.mxu0 0.0
    %1406 = vmatmul.mubr.f32.gmra.mxu0 %v1297
    %v1407 = vpop.f32.mrf.mxu0
    %v1408 = vadd.f32 %v1280, %v1407
    %v1409 = vpop.f32.mrf.mxu0
    %v1410 = vadd.f32 %v1280, %v1409
    %1411 = vdwg.mxu0
    %1412 = vmatprep.subr.mxu0 0.0
    %1413 = vmatpush1.msra.mxu0 0.0
    %1414 = vmatprep.subr.mxu0 0.0
    %1415 = vmatpush1.msra.mxu0 0.0
    %1416 = vmatprep.subr.mxu0 0.0
    %1417 = vmatpush1.msra.mxu0 0.0
    %1418 = vmatprep.subr.mxu0 0.0
    %1419 = vmatpush1.msra.mxu0 0.0
    %1420 = vmatprep.subr.mxu0 0.0
    %1421 = vmatpush1.msra.mxu0 0.0
    %1422 = vmatprep.subr.mxu0 0.0
    %1423 = vmatpush1.msra.mxu0 0.0
    %1424 = vmatprep.subr.mxu0 0.0
    %1425 = vmatpush1.msra.mxu0 0.0
    %1426 = vmatprep.subr.mxu0 0.0
    %1427 = vmatpush1.msra.mxu0 0.0
    %1428 = vmatprep.subr.mxu0 0.0
    %1429 = vmatpush1.msra.mxu0 0.0
    %1430 = vmatprep.subr.mxu0 0.0
    %1431 = vmatpush1.msra.mxu0 0.0
    %1432 = vmatprep.subr.mxu0 0.0
    %1433 = vmatpush1.msra.mxu0 0.0
    %1434 = vmatprep.subr.mxu0 0.0
    %1435 = vmatpush1.msra.mxu0 0.0
    %1436 = vmatprep.subr.mxu0 %v1233
    %1437 = vmatpush1.msra.mxu0 %v1232
    %1438 = vmatprep.subr.mxu0 %v1229
    %1439 = vmatpush1.msra.mxu0 %v1228
    %1440 = vmatprep.subr.mxu0 %v1225
    %1441 = vmatpush1.msra.mxu0 %v1224
    %1442 = vmatprep.subr.mxu0 %v1221
    %1443 = vmatpush1.msra.mxu0 %v1220
    %1444 = vmatprep.subr.mxu0 0.0
    %1445 = vmatpush2.msra.mxu0 0.0
    %1446 = vmatprep.subr.mxu0 0.0
    %1447 = vmatpush2.msra.mxu0 0.0
    %1448 = vmatprep.subr.mxu0 0.0
    %1449 = vmatpush2.msra.mxu0 0.0
    %1450 = vmatprep.subr.mxu0 0.0
    %1451 = vmatpush2.msra.mxu0 0.0
    %1452 = vmatprep.subr.mxu0 0.0
    %1453 = vmatpush2.msra.mxu0 0.0
    %1454 = vmatprep.subr.mxu0 0.0
    %1455 = vmatpush2.msra.mxu0 0.0
    %1456 = vmatprep.subr.mxu0 0.0
    %1457 = vmatpush2.msra.mxu0 0.0
    %1458 = vmatprep.subr.mxu0 0.0
    %1459 = vmatpush2.msra.mxu0 0.0
    %1460 = vmatprep.subr.mxu0 0.0
    %1461 = vmatpush2.msra.mxu0 0.0
    %1462 = vmatprep.subr.mxu0 0.0
    %1463 = vmatpush2.msra.mxu0 0.0
    %1464 = vmatprep.subr.mxu0 0.0
    %1465 = vmatpush2.msra.mxu0 0.0
    %1466 = vmatprep.subr.mxu0 0.0
    %1467 = vmatpush2.msra.mxu0 0.0
    %1468 = vmatprep.subr.mxu0 0.0
    %1469 = vmatpush2.msra.mxu0 0.0
    %1470 = vmatprep.subr.mxu0 0.0
    %1471 = vmatpush2.msra.mxu0 0.0
    %1472 = vmatprep.subr.mxu0 0.0
    %1473 = vmatpush2.msra.mxu0 0.0
    %1474 = vmatprep.subr.mxu0 0.0
    %1475 = vmatpush2.msra.mxu0 0.0
    %1476 = vmatprep.mubr.f32.mxu0 0.0
    %1477 = vmatmul.mubr.f32.gmra.mxu0 %v1283
    %v1478 = vpop.f32.mrf.mxu0
    %v1479 = vadd.f32 %v1245, %v1478
    %v1480 = vpop.f32.mrf.mxu0
    %v1481 = vadd.f32 %v1245, %v1480
    %1482 = vmatprep.mubr.f32.mxu0 0.0
    %1483 = vmatmul.mubr.f32.gmra.mxu0 %v1285
    %v1484 = vpop.f32.mrf.mxu0
    %v1485 = vadd.f32 %v1250, %v1484
    %v1486 = vpop.f32.mrf.mxu0
    %v1487 = vadd.f32 %v1250, %v1486
    %1488 = vmatprep.mubr.f32.mxu0 0.0
    %1489 = vmatmul.mubr.f32.gmra.mxu0 %v1287
    %v1490 = vpop.f32.mrf.mxu0
    %v1491 = vadd.f32 %v1255, %v1490
    %v1492 = vpop.f32.mrf.mxu0
    %v1493 = vadd.f32 %v1255, %v1492
    %1494 = vmatprep.mubr.f32.mxu0 0.0
    %1495 = vmatmul.mubr.f32.gmra.mxu0 %v1289
    %v1496 = vpop.f32.mrf.mxu0
    %v1497 = vadd.f32 %v1260, %v1496
    %v1498 = vpop.f32.mrf.mxu0
    %v1499 = vadd.f32 %v1260, %v1498
    %1500 = vmatprep.mubr.f32.mxu0 0.0
    %1501 = vmatmul.mubr.f32.gmra.mxu0 %v1291
    %v1502 = vpop.f32.mrf.mxu0
    %v1503 = vadd.f32 %v1265, %v1502
    %v1504 = vpop.f32.mrf.mxu0
    %v1505 = vadd.f32 %v1265, %v1504
    %1506 = vmatprep.mubr.f32.mxu0 0.0
    %1507 = vmatmul.mubr.f32.gmra.mxu0 %v1293
    %v1508 = vpop.f32.mrf.mxu0
    %v1509 = vadd.f32 %v1270, %v1508
    %v1510 = vpop.f32.mrf.mxu0
    %v1511 = vadd.f32 %v1270, %v1510
    %1512 = vmatprep.mubr.f32.mxu0 0.0
    %1513 = vmatmul.mubr.f32.gmra.mxu0 %v1295
    %v1514 = vpop.f32.mrf.mxu0
    %v1515 = vadd.f32 %v1275, %v1514
    %v1516 = vpop.f32.mrf.mxu0
    %v1517 = vadd.f32 %v1275, %v1516
    %1518 = vmatprep.mubr.f32.mxu0 0.0
    %1519 = vmatmul.mubr.f32.gmra.mxu0 %v1297
    %v1520 = vpop.f32.mrf.mxu0
    %v1521 = vadd.f32 %v1280, %v1520
    %v1522 = vpop.f32.mrf.mxu0
    %v1523 = vadd.f32 %v1280, %v1522
    %1524 = vdwg.mxu0
    %v1525 = vadd.f32 %v289, %v1366
    %v1526 = vadd.f32 %v291, %v1368
    %v1527 = vadd.f32 %v474, %v1479
    %v1528 = vadd.f32 %v476, %v1481
    %v1529 = vadd.f32 %v295, %v1372
    %v1530 = vadd.f32 %v297, %v1374
    %v1531 = vadd.f32 %v480, %v1485
    %v1532 = vadd.f32 %v482, %v1487
    %v1533 = vadd.f32 %v301, %v1378
    %v1534 = vadd.f32 %v303, %v1380
    %v1535 = vadd.f32 %v486, %v1491
    %v1536 = vadd.f32 %v488, %v1493
    %v1537 = vadd.f32 %v307, %v1384
    %v1538 = vadd.f32 %v309, %v1386
    %v1539 = vadd.f32 %v492, %v1497
    %v1540 = vadd.f32 %v494, %v1499
    %vm1541 = vcmp.ge.s32.totalorder %v641, 2
    %vm1542 = vcmp.ge.s32.totalorder %v642, 2
    %vm1543 = vcmp.ge.s32.totalorder %v643, 2
    %vm1544 = vcmp.ge.s32.totalorder %v644, 2
    %1545 = vrot.lane.b32.xlu0 %v1525, 2
    %v1546 = vpop.permute.xlu0 %1545
    %1547 = vrot.lane.b32.xlu0 %v1529, 2
    %v1548 = vpop.permute.xlu0 %1547
    %1549 = vrot.lane.b32.xlu0 %v1533, 2
    %v1550 = vpop.permute.xlu0 %1549
    %1551 = vrot.lane.b32.xlu0 %v1537, 2
    %v1552 = vpop.permute.xlu0 %1551
    %1553 = vrot.lane.b32.xlu0 %v1526, 2
    %v1554 = vpop.permute.xlu0 %1553
    %1555 = vrot.lane.b32.xlu0 %v1530, 2
    %v1556 = vpop.permute.xlu0 %1555
    %1557 = vrot.lane.b32.xlu0 %v1534, 2
    %v1558 = vpop.permute.xlu0 %1557
    %1559 = vrot.lane.b32.xlu0 %v1538, 2
    %v1560 = vpop.permute.xlu0 %1559
    %1561 = vrot.lane.b32.xlu0 %v1527, 2
    %v1562 = vpop.permute.xlu0 %1561
    %1563 = vrot.lane.b32.xlu0 %v1531, 2
    %v1564 = vpop.permute.xlu0 %1563
    %1565 = vrot.lane.b32.xlu0 %v1535, 2
    %v1566 = vpop.permute.xlu0 %1565
    %1567 = vrot.lane.b32.xlu0 %v1539, 2
    %v1568 = vpop.permute.xlu0 %1567
    %1569 = vrot.lane.b32.xlu0 %v1528, 2
    %v1570 = vpop.permute.xlu0 %1569
    %1571 = vrot.lane.b32.xlu0 %v1532, 2
    %v1572 = vpop.permute.xlu0 %1571
    %1573 = vrot.lane.b32.xlu0 %v1536, 2
    %v1574 = vpop.permute.xlu0 %1573
    %1575 = vrot.lane.b32.xlu0 %v1540, 2
    %v1576 = vpop.permute.xlu0 %1575
    %vm1577 = vcmp.lt.s32.totalorder %v593, 2
    %v1578 = vsel %vm1577, %v1562, %v1570
    %v1579 = vsel %vm1577, %v1564, %v1572
    %v1580 = vsel %vm1577, %v1566, %v1574
    %v1581 = vsel %vm1577, %v1568, %v1576
    %v1582 = vsel %vm1577, %v1554, %v1562
    %v1583 = vsel %vm1577, %v1556, %v1564
    %v1584 = vsel %vm1577, %v1558, %v1566
    %v1585 = vsel %vm1577, %v1560, %v1568
    %v1586 = vsel %vm1577, %v1546, %v1554
    %v1587 = vsel %vm1577, %v1548, %v1556
    %v1588 = vsel %vm1577, %v1550, %v1558
    %v1589 = vsel %vm1577, %v1552, %v1560
    %v1590 = vsel %vm1577, %v1570, %v1546
    %v1591 = vsel %vm1577, %v1572, %v1548
    %v1592 = vsel %vm1577, %v1574, %v1550
    %v1593 = vsel %vm1577, %v1576, %v1552
    %v1594 = vsel %vm1541, %v1590, 0.0
    %v1595 = vsel %vm1542, %v1586, 0.0
    %v1596 = vsel %vm1543, %v1582, 0.0
    %v1597 = vsel %vm1544, %v1578, 0.0
    %v1598 = vsel %vm1541, %v1591, 0.0
    %v1599 = vsel %vm1542, %v1587, 0.0
    %v1600 = vsel %vm1543, %v1583, 0.0
    %v1601 = vsel %vm1544, %v1579, 0.0
    %v1602 = vsel %vm1541, %v1592, 0.0
    %v1603 = vsel %vm1542, %v1588, 0.0
    %v1604 = vsel %vm1543, %v1584, 0.0
    %v1605 = vsel %vm1544, %v1580, 0.0
    %v1606 = vsel %vm1541, %v1593, 0.0
    %v1607 = vsel %vm1542, %v1589, 0.0
    %v1608 = vsel %vm1543, %v1585, 0.0
    %v1609 = vsel %vm1544, %v1581, 0.0
    %vm1610 = vcmp.lt.s32.totalorder %v641, 254
    %vm1611 = vcmp.lt.s32.totalorder %v642, 254
    %vm1612 = vcmp.lt.s32.totalorder %v643, 254
    %vm1613 = vcmp.lt.s32.totalorder %v644, 254
    %1614 = vrot.lane.b32.xlu0 %v1525, 126
    %v1615 = vpop.permute.xlu0 %1614
    %1616 = vrot.lane.b32.xlu0 %v1529, 126
    %v1617 = vpop.permute.xlu0 %1616
    %1618 = vrot.lane.b32.xlu0 %v1533, 126
    %v1619 = vpop.permute.xlu0 %1618
    %1620 = vrot.lane.b32.xlu0 %v1537, 126
    %v1621 = vpop.permute.xlu0 %1620
    %1622 = vrot.lane.b32.xlu0 %v1526, 126
    %v1623 = vpop.permute.xlu0 %1622
    %1624 = vrot.lane.b32.xlu0 %v1530, 126
    %v1625 = vpop.permute.xlu0 %1624
    %1626 = vrot.lane.b32.xlu0 %v1534, 126
    %v1627 = vpop.permute.xlu0 %1626
    %1628 = vrot.lane.b32.xlu0 %v1538, 126
    %v1629 = vpop.permute.xlu0 %1628
    %1630 = vrot.lane.b32.xlu0 %v1527, 126
    %v1631 = vpop.permute.xlu0 %1630
    %1632 = vrot.lane.b32.xlu0 %v1531, 126
    %v1633 = vpop.permute.xlu0 %1632
    %1634 = vrot.lane.b32.xlu0 %v1535, 126
    %v1635 = vpop.permute.xlu0 %1634
    %1636 = vrot.lane.b32.xlu0 %v1539, 126
    %v1637 = vpop.permute.xlu0 %1636
    %1638 = vrot.lane.b32.xlu0 %v1528, 126
    %v1639 = vpop.permute.xlu0 %1638
    %1640 = vrot.lane.b32.xlu0 %v1532, 126
    %v1641 = vpop.permute.xlu0 %1640
    %1642 = vrot.lane.b32.xlu0 %v1536, 126
    %v1643 = vpop.permute.xlu0 %1642
    %1644 = vrot.lane.b32.xlu0 %v1540, 126
    %v1645 = vpop.permute.xlu0 %1644
    %vm1646 = vcmp.lt.s32.totalorder %v593, 126
    %v1647 = vsel %vm1646, %v1631, %v1639
    %v1648 = vsel %vm1646, %v1633, %v1641
    %v1649 = vsel %vm1646, %v1635, %v1643
    %v1650 = vsel %vm1646, %v1637, %v1645
    %v1651 = vsel %vm1646, %v1623, %v1631
    %v1652 = vsel %vm1646, %v1625, %v1633
    %v1653 = vsel %vm1646, %v1627, %v1635
    %v1654 = vsel %vm1646, %v1629, %v1637
    %v1655 = vsel %vm1646, %v1615, %v1623
    %v1656 = vsel %vm1646, %v1617, %v1625
    %v1657 = vsel %vm1646, %v1619, %v1627
    %v1658 = vsel %vm1646, %v1621, %v1629
    %v1659 = vsel %vm1646, %v1639, %v1615
    %v1660 = vsel %vm1646, %v1641, %v1617
    %v1661 = vsel %vm1646, %v1643, %v1619
    %v1662 = vsel %vm1646, %v1645, %v1621
    %v1663 = vsel %vm1610, %v1655, 0.0
    %v1664 = vsel %vm1611, %v1651, 0.0
    %v1665 = vsel %vm1612, %v1647, 0.0
    %v1666 = vsel %vm1613, %v1659, 0.0
    %v1667 = vsel %vm1610, %v1656, 0.0
    %v1668 = vsel %vm1611, %v1652, 0.0
    %v1669 = vsel %vm1612, %v1648, 0.0
    %v1670 = vsel %vm1613, %v1660, 0.0
    %v1671 = vsel %vm1610, %v1657, 0.0
    %v1672 = vsel %vm1611, %v1653, 0.0
    %v1673 = vsel %vm1612, %v1649, 0.0
    %v1674 = vsel %vm1613, %v1661, 0.0
    %v1675 = vsel %vm1610, %v1658, 0.0
    %v1676 = vsel %vm1611, %v1654, 0.0
    %v1677 = vsel %vm1612, %v1650, 0.0
    %v1678 = vsel %vm1613, %v1662, 0.0
    %v1679 = vld [vmem:[#allocation5 + $0xe0] sm:$0xff]
    %v1680 = vld [vmem:[#allocation5 + $0xe8] sm:$0xff]
    %v1681 = vld [vmem:[#allocation5 + $0xf0] sm:$0xff]
    %v1682 = vld [vmem:[#allocation5 + $0xf8] sm:$0xff]
    %v1683 = vld [vmem:[#allocation5 + $0x100] sm:$0xff]
    %v1684 = vld [vmem:[#allocation5 + $0x108] sm:$0xff]
    %v1685 = vld [vmem:[#allocation5 + $0x110] sm:$0xff]
    %v1686 = vld [vmem:[#allocation5 + $0x118] sm:$0xff]
    %1688 = vset.pattern.permute.xlu0 127
    %1689 = vperm.xlu0 %1688, %v1679
    %v1690 = vpop.permute.xlu0 %1689
    %1693 = vset.pattern.permute.xlu0 127
    %1694 = vperm.xlu0 %1693, %v1680
    %v1695 = vpop.permute.xlu0 %1694
    %1698 = vset.pattern.permute.xlu0 127
    %1699 = vperm.xlu0 %1698, %v1681
    %v1700 = vpop.permute.xlu0 %1699
    %1703 = vset.pattern.permute.xlu0 127
    %1704 = vperm.xlu0 %1703, %v1682
    %v1705 = vpop.permute.xlu0 %1704
    %1708 = vset.pattern.permute.xlu0 127
    %1709 = vperm.xlu0 %1708, %v1683
    %v1710 = vpop.permute.xlu0 %1709
    %1713 = vset.pattern.permute.xlu0 127
    %1714 = vperm.xlu0 %1713, %v1684
    %v1715 = vpop.permute.xlu0 %1714
    %1718 = vset.pattern.permute.xlu0 127
    %1719 = vperm.xlu0 %1718, %v1685
    %v1720 = vpop.permute.xlu0 %1719
    %1723 = vset.pattern.permute.xlu0 127
    %1724 = vperm.xlu0 %1723, %v1686
    %v1725 = vpop.permute.xlu0 %1724
    %v1727 = vsel %vm831, %v1679, 0
    %v1729 = vsel %vm831, %v1680, 0
    %v1731 = vsel %vm831, %v1681, 0
    %v1733 = vsel %vm831, %v1682, 0
    %v1735 = vsel %vm831, %v1683, 0
    %v1737 = vsel %vm831, %v1684, 0
    %v1739 = vsel %vm831, %v1685, 0
    %v1741 = vsel %vm831, %v1686, 0
    %1743 = vmatprep.subr.mxu0 0.0
    %1744 = vmatpush1.msra.mxu0 0.0
    %1745 = vmatprep.subr.mxu0 0.0
    %1746 = vmatpush1.msra.mxu0 0.0
    %1747 = vmatprep.subr.mxu0 0.0
    %1748 = vmatpush1.msra.mxu0 0.0
    %1749 = vmatprep.subr.mxu0 0.0
    %1750 = vmatpush1.msra.mxu0 0.0
    %1751 = vmatprep.subr.mxu0 %v1676
    %1752 = vmatpush1.msra.mxu0 %v1675
    %1753 = vmatprep.subr.mxu0 %v1672
    %1754 = vmatpush1.msra.mxu0 %v1671
    %1755 = vmatprep.subr.mxu0 %v1668
    %1756 = vmatpush1.msra.mxu0 %v1667
    %1757 = vmatprep.subr.mxu0 %v1664
    %1758 = vmatpush1.msra.mxu0 %v1663
    %1759 = vmatprep.subr.mxu0 %v1538
    %1760 = vmatpush1.msra.mxu0 %v1537
    %1761 = vmatprep.subr.mxu0 %v1534
    %1762 = vmatpush1.msra.mxu0 %v1533
    %1763 = vmatprep.subr.mxu0 %v1530
    %1764 = vmatpush1.msra.mxu0 %v1529
    %1765 = vmatprep.subr.mxu0 %v1526
    %1766 = vmatpush1.msra.mxu0 %v1525
    %1767 = vmatprep.subr.mxu0 %v1607
    %1768 = vmatpush1.msra.mxu0 %v1606
    %1769 = vmatprep.subr.mxu0 %v1603
    %1770 = vmatpush1.msra.mxu0 %v1602
    %1771 = vmatprep.subr.mxu0 %v1599
    %1772 = vmatpush1.msra.mxu0 %v1598
    %1773 = vmatprep.subr.mxu0 %v1595
    %1774 = vmatpush1.msra.mxu0 %v1594
    %1775 = vmatprep.subr.mxu0 0.0
    %1776 = vmatpush2.msra.mxu0 0.0
    %1777 = vmatprep.subr.mxu0 0.0
    %1778 = vmatpush2.msra.mxu0 0.0
    %1779 = vmatprep.subr.mxu0 0.0
    %1780 = vmatpush2.msra.mxu0 0.0
    %1781 = vmatprep.subr.mxu0 0.0
    %1782 = vmatpush2.msra.mxu0 0.0
    %1783 = vmatprep.subr.mxu0 0.0
    %1784 = vmatpush2.msra.mxu0 0.0
    %1785 = vmatprep.subr.mxu0 0.0
    %1786 = vmatpush2.msra.mxu0 0.0
    %1787 = vmatprep.subr.mxu0 0.0
    %1788 = vmatpush2.msra.mxu0 0.0
    %1789 = vmatprep.subr.mxu0 0.0
    %1790 = vmatpush2.msra.mxu0 0.0
    %1791 = vmatprep.subr.mxu0 0.0
    %1792 = vmatpush2.msra.mxu0 0.0
    %1793 = vmatprep.subr.mxu0 0.0
    %1794 = vmatpush2.msra.mxu0 0.0
    %1795 = vmatprep.subr.mxu0 0.0
    %1796 = vmatpush2.msra.mxu0 0.0
    %1797 = vmatprep.subr.mxu0 0.0
    %1798 = vmatpush2.msra.mxu0 0.0
    %1799 = vmatprep.subr.mxu0 0.0
    %1800 = vmatpush2.msra.mxu0 0.0
    %1801 = vmatprep.subr.mxu0 0.0
    %1802 = vmatpush2.msra.mxu0 0.0
    %1803 = vmatprep.subr.mxu0 0.0
    %1804 = vmatpush2.msra.mxu0 0.0
    %1805 = vmatprep.subr.mxu0 0.0
    %1806 = vmatpush2.msra.mxu0 0.0
    %1807 = vmatprep.mubr.f32.mxu0 0.0
    %1808 = vmatmul.mubr.f32.gmra.mxu0 %v1727
    %v1809 = vpop.f32.mrf.mxu0
    %v1810 = vadd.f32 %v1690, %v1809
    %v1811 = vpop.f32.mrf.mxu0
    %v1812 = vadd.f32 %v1690, %v1811
    %1813 = vmatprep.mubr.f32.mxu0 0.0
    %1814 = vmatmul.mubr.f32.gmra.mxu0 %v1729
    %v1815 = vpop.f32.mrf.mxu0
    %v1816 = vadd.f32 %v1695, %v1815
    %v1817 = vpop.f32.mrf.mxu0
    %v1818 = vadd.f32 %v1695, %v1817
    %1819 = vmatprep.mubr.f32.mxu0 0.0
    %1820 = vmatmul.mubr.f32.gmra.mxu0 %v1731
    %v1821 = vpop.f32.mrf.mxu0
    %v1822 = vadd.f32 %v1700, %v1821
    %v1823 = vpop.f32.mrf.mxu0
    %v1824 = vadd.f32 %v1700, %v1823
    %1825 = vmatprep.mubr.f32.mxu0 0.0
    %1826 = vmatmul.mubr.f32.gmra.mxu0 %v1733
    %v1827 = vpop.f32.mrf.mxu0
    %v1828 = vadd.f32 %v1705, %v1827
    %v1829 = vpop.f32.mrf.mxu0
    %v1830 = vadd.f32 %v1705, %v1829
    %1831 = vmatprep.mubr.f32.mxu0 0.0
    %1832 = vmatmul.mubr.f32.gmra.mxu0 %v1735
    %v1833 = vpop.f32.mrf.mxu0
    %v1834 = vadd.f32 %v1710, %v1833
    %v1835 = vpop.f32.mrf.mxu0
    %v1836 = vadd.f32 %v1710, %v1835
    %1837 = vmatprep.mubr.f32.mxu0 0.0
    %1838 = vmatmul.mubr.f32.gmra.mxu0 %v1737
    %v1839 = vpop.f32.mrf.mxu0
    %v1840 = vadd.f32 %v1715, %v1839
    %v1841 = vpop.f32.mrf.mxu0
    %v1842 = vadd.f32 %v1715, %v1841
    %1843 = vmatprep.mubr.f32.mxu0 0.0
    %1844 = vmatmul.mubr.f32.gmra.mxu0 %v1739
    %v1845 = vpop.f32.mrf.mxu0
    %v1846 = vadd.f32 %v1720, %v1845
    %v1847 = vpop.f32.mrf.mxu0
    %v1848 = vadd.f32 %v1720, %v1847
    %1849 = vmatprep.mubr.f32.mxu0 0.0
    %1850 = vmatmul.mubr.f32.gmra.mxu0 %v1741
    %v1851 = vpop.f32.mrf.mxu0
    %v1852 = vadd.f32 %v1725, %v1851
    %v1853 = vpop.f32.mrf.mxu0
    %v1854 = vadd.f32 %v1725, %v1853
    %1855 = vdwg.mxu0
    %1856 = vmatprep.subr.mxu0 0.0
    %1857 = vmatpush1.msra.mxu0 0.0
    %1858 = vmatprep.subr.mxu0 0.0
    %1859 = vmatpush1.msra.mxu0 0.0
    %1860 = vmatprep.subr.mxu0 0.0
    %1861 = vmatpush1.msra.mxu0 0.0
    %1862 = vmatprep.subr.mxu0 0.0
    %1863 = vmatpush1.msra.mxu0 0.0
    %1864 = vmatprep.subr.mxu0 %v1678
    %1865 = vmatpush1.msra.mxu0 %v1677
    %1866 = vmatprep.subr.mxu0 %v1674
    %1867 = vmatpush1.msra.mxu0 %v1673
    %1868 = vmatprep.subr.mxu0 %v1670
    %1869 = vmatpush1.msra.mxu0 %v1669
    %1870 = vmatprep.subr.mxu0 %v1666
    %1871 = vmatpush1.msra.mxu0 %v1665
    %1872 = vmatprep.subr.mxu0 %v1540
    %1873 = vmatpush1.msra.mxu0 %v1539
    %1874 = vmatprep.subr.mxu0 %v1536
    %1875 = vmatpush1.msra.mxu0 %v1535
    %1876 = vmatprep.subr.mxu0 %v1532
    %1877 = vmatpush1.msra.mxu0 %v1531
    %1878 = vmatprep.subr.mxu0 %v1528
    %1879 = vmatpush1.msra.mxu0 %v1527
    %1880 = vmatprep.subr.mxu0 %v1609
    %1881 = vmatpush1.msra.mxu0 %v1608
    %1882 = vmatprep.subr.mxu0 %v1605
    %1883 = vmatpush1.msra.mxu0 %v1604
    %1884 = vmatprep.subr.mxu0 %v1601
    %1885 = vmatpush1.msra.mxu0 %v1600
    %1886 = vmatprep.subr.mxu0 %v1597
    %1887 = vmatpush1.msra.mxu0 %v1596
    %1888 = vmatprep.subr.mxu0 0.0
    %1889 = vmatpush2.msra.mxu0 0.0
    %1890 = vmatprep.subr.mxu0 0.0
    %1891 = vmatpush2.msra.mxu0 0.0
    %1892 = vmatprep.subr.mxu0 0.0
    %1893 = vmatpush2.msra.mxu0 0.0
    %1894 = vmatprep.subr.mxu0 0.0
    %1895 = vmatpush2.msra.mxu0 0.0
    %1896 = vmatprep.subr.mxu0 0.0
    %1897 = vmatpush2.msra.mxu0 0.0
    %1898 = vmatprep.subr.mxu0 0.0
    %1899 = vmatpush2.msra.mxu0 0.0
    %1900 = vmatprep.subr.mxu0 0.0
    %1901 = vmatpush2.msra.mxu0 0.0
    %1902 = vmatprep.subr.mxu0 0.0
    %1903 = vmatpush2.msra.mxu0 0.0
    %1904 = vmatprep.subr.mxu0 0.0
    %1905 = vmatpush2.msra.mxu0 0.0
    %1906 = vmatprep.subr.mxu0 0.0
    %1907 = vmatpush2.msra.mxu0 0.0
    %1908 = vmatprep.subr.mxu0 0.0
    %1909 = vmatpush2.msra.mxu0 0.0
    %1910 = vmatprep.subr.mxu0 0.0
    %1911 = vmatpush2.msra.mxu0 0.0
    %1912 = vmatprep.subr.mxu0 0.0
    %1913 = vmatpush2.msra.mxu0 0.0
    %1914 = vmatprep.subr.mxu0 0.0
    %1915 = vmatpush2.msra.mxu0 0.0
    %1916 = vmatprep.subr.mxu0 0.0
    %1917 = vmatpush2.msra.mxu0 0.0
    %1918 = vmatprep.subr.mxu0 0.0
    %1919 = vmatpush2.msra.mxu0 0.0
    %1920 = vmatprep.mubr.f32.mxu0 0.0
    %1921 = vmatmul.mubr.f32.gmra.mxu0 %v1727
    %v1922 = vpop.f32.mrf.mxu0
    %v1923 = vadd.f32 %v1690, %v1922
    %v1924 = vpop.f32.mrf.mxu0
    %v1925 = vadd.f32 %v1690, %v1924
    %1926 = vmatprep.mubr.f32.mxu0 0.0
    %1927 = vmatmul.mubr.f32.gmra.mxu0 %v1729
    %v1928 = vpop.f32.mrf.mxu0
    %v1929 = vadd.f32 %v1695, %v1928
    %v1930 = vpop.f32.mrf.mxu0
    %v1931 = vadd.f32 %v1695, %v1930
    %1932 = vmatprep.mubr.f32.mxu0 0.0
    %1933 = vmatmul.mubr.f32.gmra.mxu0 %v1731
    %v1934 = vpop.f32.mrf.mxu0
    %v1935 = vadd.f32 %v1700, %v1934
    %v1936 = vpop.f32.mrf.mxu0
    %v1937 = vadd.f32 %v1700, %v1936
    %1938 = vmatprep.mubr.f32.mxu0 0.0
    %1939 = vmatmul.mubr.f32.gmra.mxu0 %v1733
    %v1940 = vpop.f32.mrf.mxu0
    %v1941 = vadd.f32 %v1705, %v1940
    %v1942 = vpop.f32.mrf.mxu0
    %v1943 = vadd.f32 %v1705, %v1942
    %1944 = vmatprep.mubr.f32.mxu0 0.0
    %1945 = vmatmul.mubr.f32.gmra.mxu0 %v1735
    %v1946 = vpop.f32.mrf.mxu0
    %v1947 = vadd.f32 %v1710, %v1946
    %v1948 = vpop.f32.mrf.mxu0
    %v1949 = vadd.f32 %v1710, %v1948
    %1950 = vmatprep.mubr.f32.mxu0 0.0
    %1951 = vmatmul.mubr.f32.gmra.mxu0 %v1737
    %v1952 = vpop.f32.mrf.mxu0
    %v1953 = vadd.f32 %v1715, %v1952
    %v1954 = vpop.f32.mrf.mxu0
    %v1955 = vadd.f32 %v1715, %v1954
    %1956 = vmatprep.mubr.f32.mxu0 0.0
    %1957 = vmatmul.mubr.f32.gmra.mxu0 %v1739
    %v1958 = vpop.f32.mrf.mxu0
    %v1959 = vadd.f32 %v1720, %v1958
    %v1960 = vpop.f32.mrf.mxu0
    %v1961 = vadd.f32 %v1720, %v1960
    %1962 = vmatprep.mubr.f32.mxu0 0.0
    %1963 = vmatmul.mubr.f32.gmra.mxu0 %v1741
    %v1964 = vpop.f32.mrf.mxu0
    %v1965 = vadd.f32 %v1725, %v1964
    %v1966 = vpop.f32.mrf.mxu0
    %v1967 = vadd.f32 %v1725, %v1966
    %1968 = vdwg.mxu0
    %v1969 = vadd.f32 %v1810, %v361
    %v1970 = vadd.f32 %v1812, %v363
    %v1971 = vadd.f32 %v1923, %v546
    %v1972 = vadd.f32 %v1925, %v548
    %v1973 = vadd.f32 %v1816, %v367
    %v1974 = vadd.f32 %v1818, %v369
    %v1975 = vadd.f32 %v1929, %v552
    %v1976 = vadd.f32 %v1931, %v554
    %v1977 = vadd.f32 %v1822, %v373
    %v1978 = vadd.f32 %v1824, %v375
    %v1979 = vadd.f32 %v1935, %v558
    %v1980 = vadd.f32 %v1937, %v560
    %v1981 = vadd.f32 %v1828, %v379
    %v1982 = vadd.f32 %v1830, %v381
    %v1983 = vadd.f32 %v1941, %v564
    %v1984 = vadd.f32 %v1943, %v566
    %v1985 = vadd.f32 %v1834, %v385
    %v1986 = vadd.f32 %v1836, %v387
    %v1987 = vadd.f32 %v1947, %v570
    %v1988 = vadd.f32 %v1949, %v572
    %v1989 = vadd.f32 %v1840, %v391
    %v1990 = vadd.f32 %v1842, %v393
    %v1991 = vadd.f32 %v1953, %v576
    %v1992 = vadd.f32 %v1955, %v578
    %v1993 = vadd.f32 %v1846, %v397
    %v1994 = vadd.f32 %v1848, %v399
    %v1995 = vadd.f32 %v1959, %v582
    %v1996 = vadd.f32 %v1961, %v584
    %v1997 = vadd.f32 %v1852, %v403
    %v1998 = vadd.f32 %v1854, %v405
    %v1999 = vadd.f32 %v1965, %v588
    %v2000 = vadd.f32 %v1967, %v590
    %v2001 = vtanh.pop %v1969
    %v2002 = vtanh.pop %v1970
    %v2003 = vtanh.pop %v1971
    %v2004 = vtanh.pop %v1972
    %v2005 = vtanh.pop %v1973
    %v2006 = vtanh.pop %v1974
    %v2007 = vtanh.pop %v1975
    %v2008 = vtanh.pop %v1976
    %v2009 = vtanh.pop %v1977
    %v2010 = vtanh.pop %v1978
    %v2011 = vtanh.pop %v1979
    %v2012 = vtanh.pop %v1980
    %v2013 = vtanh.pop %v1981
    %v2014 = vtanh.pop %v1982
    %v2015 = vtanh.pop %v1983
    %v2016 = vtanh.pop %v1984
    %v2017 = vxor.u32 %v1985, 2147483648
    %v2018 = vxor.u32 %v1986, 2147483648
    %v2019 = vxor.u32 %v1987, 2147483648
    %v2020 = vxor.u32 %v1988, 2147483648
    %v2021 = vxor.u32 %v1989, 2147483648
    %v2022 = vxor.u32 %v1990, 2147483648
    %v2023 = vxor.u32 %v1991, 2147483648
    %v2024 = vxor.u32 %v1992, 2147483648
    %v2025 = vxor.u32 %v1993, 2147483648
    %v2026 = vxor.u32 %v1994, 2147483648
    %v2027 = vxor.u32 %v1995, 2147483648
    %v2028 = vxor.u32 %v1996, 2147483648
    %v2029 = vxor.u32 %v1997, 2147483648
    %v2030 = vxor.u32 %v1998, 2147483648
    %v2031 = vxor.u32 %v1999, 2147483648
    %v2032 = vxor.u32 %v2000, 2147483648
    %v2033 = vmul.f32 %v2017, 1.442695
    %v2034 = vpow.pop %v2033
    %v2035 = vmul.f32 %v2018, 1.442695
    %v2036 = vpow.pop %v2035
    %v2037 = vmul.f32 %v2019, 1.442695
    %v2038 = vpow.pop %v2037
    %v2039 = vmul.f32 %v2020, 1.442695
    %v2040 = vpow.pop %v2039
    %v2041 = vmul.f32 %v2021, 1.442695
    %v2042 = vpow.pop %v2041
    %v2043 = vmul.f32 %v2022, 1.442695
    %v2044 = vpow.pop %v2043
    %v2045 = vmul.f32 %v2023, 1.442695
    %v2046 = vpow.pop %v2045
    %v2047 = vmul.f32 %v2024, 1.442695
    %v2048 = vpow.pop %v2047
    %v2049 = vmul.f32 %v2025, 1.442695
    %v2050 = vpow.pop %v2049
    %v2051 = vmul.f32 %v2026, 1.442695
    %v2052 = vpow.pop %v2051
    %v2053 = vmul.f32 %v2027, 1.442695
    %v2054 = vpow.pop %v2053
    %v2055 = vmul.f32 %v2028, 1.442695
    %v2056 = vpow.pop %v2055
    %v2057 = vmul.f32 %v2029, 1.442695
    %v2058 = vpow.pop %v2057
    %v2059 = vmul.f32 %v2030, 1.442695
    %v2060 = vpow.pop %v2059
    %v2061 = vmul.f32 %v2031, 1.442695
    %v2062 = vpow.pop %v2061
    %v2063 = vmul.f32 %v2032, 1.442695
    %v2064 = vpow.pop %v2063
    %v2065 = vadd.f32 %v2034, 1.0
    %v2066 = vadd.f32 %v2036, 1.0
    %v2067 = vadd.f32 %v2038, 1.0
    %v2068 = vadd.f32 %v2040, 1.0
    %v2069 = vadd.f32 %v2042, 1.0
    %v2070 = vadd.f32 %v2044, 1.0
    %v2071 = vadd.f32 %v2046, 1.0
    %v2072 = vadd.f32 %v2048, 1.0
    %v2073 = vadd.f32 %v2050, 1.0
    %v2074 = vadd.f32 %v2052, 1.0
    %v2075 = vadd.f32 %v2054, 1.0
    %v2076 = vadd.f32 %v2056, 1.0
    %v2077 = vadd.f32 %v2058, 1.0
    %v2078 = vadd.f32 %v2060, 1.0
    %v2079 = vadd.f32 %v2062, 1.0
    %v2080 = vadd.f32 %v2064, 1.0
    %v2081 = vrcp.pop %v2065
    %v2082 = vmul.f32 1.0, %v2081
    %v2083 = vrcp.pop %v2066
    %v2084 = vmul.f32 1.0, %v2083
    %v2085 = vrcp.pop %v2067
    %v2086 = vmul.f32 1.0, %v2085
    %v2087 = vrcp.pop %v2068
    %v2088 = vmul.f32 1.0, %v2087
    %v2089 = vrcp.pop %v2069
    %v2090 = vmul.f32 1.0, %v2089
    %v2091 = vrcp.pop %v2070
    %v2092 = vmul.f32 1.0, %v2091
    %v2093 = vrcp.pop %v2071
    %v2094 = vmul.f32 1.0, %v2093
    %v2095 = vrcp.pop %v2072
    %v2096 = vmul.f32 1.0, %v2095
    %v2097 = vrcp.pop %v2073
    %v2098 = vmul.f32 1.0, %v2097
    %v2099 = vrcp.pop %v2074
    %v2100 = vmul.f32 1.0, %v2099
    %v2101 = vrcp.pop %v2075
    %v2102 = vmul.f32 1.0, %v2101
    %v2103 = vrcp.pop %v2076
    %v2104 = vmul.f32 1.0, %v2103
    %v2105 = vrcp.pop %v2077
    %v2106 = vmul.f32 1.0, %v2105
    %v2107 = vrcp.pop %v2078
    %v2108 = vmul.f32 1.0, %v2107
    %v2109 = vrcp.pop %v2079
    %v2110 = vmul.f32 1.0, %v2109
    %v2111 = vrcp.pop %v2080
    %v2112 = vmul.f32 1.0, %v2111
    %v2113 = vmul.f32 %v2001, %v2082
    %v2114 = vmul.f32 %v2002, %v2084
    %v2115 = vmul.f32 %v2003, %v2086
    %v2116 = vmul.f32 %v2004, %v2088
    %v2117 = vmul.f32 %v2005, %v2090
    %v2118 = vmul.f32 %v2006, %v2092
    %v2119 = vmul.f32 %v2007, %v2094
    %v2120 = vmul.f32 %v2008, %v2096
    %v2121 = vmul.f32 %v2009, %v2098
    %v2122 = vmul.f32 %v2010, %v2100
    %v2123 = vmul.f32 %v2011, %v2102
    %v2124 = vmul.f32 %v2012, %v2104
    %v2125 = vmul.f32 %v2013, %v2106
    %v2126 = vmul.f32 %v2014, %v2108
    %v2127 = vmul.f32 %v2015, %v2110
    %v2128 = vmul.f32 %v2016, %v2112
    %v2129 = vld [vmem:[#allocation5 + $0x160] sm:$0xff]
    %v2130 = vld [vmem:[#allocation5 + $0x168] sm:$0xff]
    %v2131 = vld [vmem:[#allocation5 + $0x170] sm:$0xff]
    %v2132 = vld [vmem:[#allocation5 + $0x178] sm:$0xff]
    %2134 = vset.pattern.permute.xlu0 127
    %2135 = vperm.xlu0 %2134, %v2129
    %v2136 = vpop.permute.xlu0 %2135
    %2139 = vset.pattern.permute.xlu0 127
    %2140 = vperm.xlu0 %2139, %v2130
    %v2141 = vpop.permute.xlu0 %2140
    %2144 = vset.pattern.permute.xlu0 127
    %2145 = vperm.xlu0 %2144, %v2131
    %v2146 = vpop.permute.xlu0 %2145
    %2149 = vset.pattern.permute.xlu0 127
    %2150 = vperm.xlu0 %2149, %v2132
    %v2151 = vpop.permute.xlu0 %2150
    %v2153 = vsel %vm1282, %v2129, 0
    %v2155 = vsel %vm1282, %v2130, 0
    %v2157 = vsel %vm1282, %v2131, 0
    %v2159 = vsel %vm1282, %v2132, 0
    %2161 = vmatprep.subr.mxu0 0.0
    %2162 = vmatpush1.msra.mxu0 0.0
    %2163 = vmatprep.subr.mxu0 0.0
    %2164 = vmatpush1.msra.mxu0 0.0
    %2165 = vmatprep.subr.mxu0 0.0
    %2166 = vmatpush1.msra.mxu0 0.0
    %2167 = vmatprep.subr.mxu0 0.0
    %2168 = vmatpush1.msra.mxu0 0.0
    %2169 = vmatprep.subr.mxu0 0.0
    %2170 = vmatpush1.msra.mxu0 0.0
    %2171 = vmatprep.subr.mxu0 0.0
    %2172 = vmatpush1.msra.mxu0 0.0
    %2173 = vmatprep.subr.mxu0 0.0
    %2174 = vmatpush1.msra.mxu0 0.0
    %2175 = vmatprep.subr.mxu0 0.0
    %2176 = vmatpush1.msra.mxu0 0.0
    %2177 = vmatprep.subr.mxu0 0.0
    %2178 = vmatpush1.msra.mxu0 0.0
    %2179 = vmatprep.subr.mxu0 0.0
    %2180 = vmatpush1.msra.mxu0 0.0
    %2181 = vmatprep.subr.mxu0 0.0
    %2182 = vmatpush1.msra.mxu0 0.0
    %2183 = vmatprep.subr.mxu0 0.0
    %2184 = vmatpush1.msra.mxu0 0.0
    %2185 = vmatprep.subr.mxu0 %v2126
    %2186 = vmatpush1.msra.mxu0 %v2125
    %2187 = vmatprep.subr.mxu0 %v2122
    %2188 = vmatpush1.msra.mxu0 %v2121
    %2189 = vmatprep.subr.mxu0 %v2118
    %2190 = vmatpush1.msra.mxu0 %v2117
    %2191 = vmatprep.subr.mxu0 %v2114
    %2192 = vmatpush1.msra.mxu0 %v2113
    %2193 = vmatprep.subr.mxu0 0.0
    %2194 = vmatpush2.msra.mxu0 0.0
    %2195 = vmatprep.subr.mxu0 0.0
    %2196 = vmatpush2.msra.mxu0 0.0
    %2197 = vmatprep.subr.mxu0 0.0
    %2198 = vmatpush2.msra.mxu0 0.0
    %2199 = vmatprep.subr.mxu0 0.0
    %2200 = vmatpush2.msra.mxu0 0.0
    %2201 = vmatprep.subr.mxu0 0.0
    %2202 = vmatpush2.msra.mxu0 0.0
    %2203 = vmatprep.subr.mxu0 0.0
    %2204 = vmatpush2.msra.mxu0 0.0
    %2205 = vmatprep.subr.mxu0 0.0
    %2206 = vmatpush2.msra.mxu0 0.0
    %2207 = vmatprep.subr.mxu0 0.0
    %2208 = vmatpush2.msra.mxu0 0.0
    %2209 = vmatprep.subr.mxu0 0.0
    %2210 = vmatpush2.msra.mxu0 0.0
    %2211 = vmatprep.subr.mxu0 0.0
    %2212 = vmatpush2.msra.mxu0 0.0
    %2213 = vmatprep.subr.mxu0 0.0
    %2214 = vmatpush2.msra.mxu0 0.0
    %2215 = vmatprep.subr.mxu0 0.0
    %2216 = vmatpush2.msra.mxu0 0.0
    %2217 = vmatprep.subr.mxu0 0.0
    %2218 = vmatpush2.msra.mxu0 0.0
    %2219 = vmatprep.subr.mxu0 0.0
    %2220 = vmatpush2.msra.mxu0 0.0
    %2221 = vmatprep.subr.mxu0 0.0
    %2222 = vmatpush2.msra.mxu0 0.0
    %2223 = vmatprep.subr.mxu0 0.0
    %2224 = vmatpush2.msra.mxu0 0.0
    %2225 = vmatprep.mubr.f32.mxu0 0.0
    %2226 = vmatmul.mubr.f32.gmra.mxu0 %v2153
    %v2227 = vpop.f32.mrf.mxu0
    %v2228 = vadd.f32 %v2136, %v2227
    %v2229 = vpop.f32.mrf.mxu0
    %v2230 = vadd.f32 %v2136, %v2229
    %2231 = vmatprep.mubr.f32.mxu0 0.0
    %2232 = vmatmul.mubr.f32.gmra.mxu0 %v2155
    %v2233 = vpop.f32.mrf.mxu0
    %v2234 = vadd.f32 %v2141, %v2233
    %v2235 = vpop.f32.mrf.mxu0
    %v2236 = vadd.f32 %v2141, %v2235
    %2237 = vmatprep.mubr.f32.mxu0 0.0
    %2238 = vmatmul.mubr.f32.gmra.mxu0 %v2157
    %v2239 = vpop.f32.mrf.mxu0
    %v2240 = vadd.f32 %v2146, %v2239
    %v2241 = vpop.f32.mrf.mxu0
    %v2242 = vadd.f32 %v2146, %v2241
    %2243 = vmatprep.mubr.f32.mxu0 0.0
    %2244 = vmatmul.mubr.f32.gmra.mxu0 %v2159
    %v2245 = vpop.f32.mrf.mxu0
    %v2246 = vadd.f32 %v2151, %v2245
    %v2247 = vpop.f32.mrf.mxu0
    %v2248 = vadd.f32 %v2151, %v2247
    %2249 = vdwg.mxu0
    %2250 = vmatprep.subr.mxu0 0.0
    %2251 = vmatpush1.msra.mxu0 0.0
    %2252 = vmatprep.subr.mxu0 0.0
    %2253 = vmatpush1.msra.mxu0 0.0
    %2254 = vmatprep.subr.mxu0 0.0
    %2255 = vmatpush1.msra.mxu0 0.0
    %2256 = vmatprep.subr.mxu0 0.0
    %2257 = vmatpush1.msra.mxu0 0.0
    %2258 = vmatprep.subr.mxu0 0.0
    %2259 = vmatpush1.msra.mxu0 0.0
    %2260 = vmatprep.subr.mxu0 0.0
    %2261 = vmatpush1.msra.mxu0 0.0
    %2262 = vmatprep.subr.mxu0 0.0
    %2263 = vmatpush1.msra.mxu0 0.0
    %2264 = vmatprep.subr.mxu0 0.0
    %2265 = vmatpush1.msra.mxu0 0.0
    %2266 = vmatprep.subr.mxu0 0.0
    %2267 = vmatpush1.msra.mxu0 0.0
    %2268 = vmatprep.subr.mxu0 0.0
    %2269 = vmatpush1.msra.mxu0 0.0
    %2270 = vmatprep.subr.mxu0 0.0
    %2271 = vmatpush1.msra.mxu0 0.0
    %2272 = vmatprep.subr.mxu0 0.0
    %2273 = vmatpush1.msra.mxu0 0.0
    %2274 = vmatprep.subr.mxu0 %v2128
    %2275 = vmatpush1.msra.mxu0 %v2127
    %2276 = vmatprep.subr.mxu0 %v2124
    %2277 = vmatpush1.msra.mxu0 %v2123
    %2278 = vmatprep.subr.mxu0 %v2120
    %2279 = vmatpush1.msra.mxu0 %v2119
    %2280 = vmatprep.subr.mxu0 %v2116
    %2281 = vmatpush1.msra.mxu0 %v2115
    %2282 = vmatprep.subr.mxu0 0.0
    %2283 = vmatpush2.msra.mxu0 0.0
    %2284 = vmatprep.subr.mxu0 0.0
    %2285 = vmatpush2.msra.mxu0 0.0
    %2286 = vmatprep.subr.mxu0 0.0
    %2287 = vmatpush2.msra.mxu0 0.0
    %2288 = vmatprep.subr.mxu0 0.0
    %2289 = vmatpush2.msra.mxu0 0.0
    %2290 = vmatprep.subr.mxu0 0.0
    %2291 = vmatpush2.msra.mxu0 0.0
    %2292 = vmatprep.subr.mxu0 0.0
    %2293 = vmatpush2.msra.mxu0 0.0
    %2294 = vmatprep.subr.mxu0 0.0
    %2295 = vmatpush2.msra.mxu0 0.0
    %2296 = vmatprep.subr.mxu0 0.0
    %2297 = vmatpush2.msra.mxu0 0.0
    %2298 = vmatprep.subr.mxu0 0.0
    %2299 = vmatpush2.msra.mxu0 0.0
    %2300 = vmatprep.subr.mxu0 0.0
    %2301 = vmatpush2.msra.mxu0 0.0
    %2302 = vmatprep.subr.mxu0 0.0
    %2303 = vmatpush2.msra.mxu0 0.0
    %2304 = vmatprep.subr.mxu0 0.0
    %2305 = vmatpush2.msra.mxu0 0.0
    %2306 = vmatprep.subr.mxu0 0.0
    %2307 = vmatpush2.msra.mxu0 0.0
    %2308 = vmatprep.subr.mxu0 0.0
    %2309 = vmatpush2.msra.mxu0 0.0
    %2310 = vmatprep.subr.mxu0 0.0
    %2311 = vmatpush2.msra.mxu0 0.0
    %2312 = vmatprep.subr.mxu0 0.0
    %2313 = vmatpush2.msra.mxu0 0.0
    %2314 = vmatprep.mubr.f32.mxu0 0.0
    %2315 = vmatmul.mubr.f32.gmra.mxu0 %v2153
    %v2316 = vpop.f32.mrf.mxu0
    %v2317 = vadd.f32 %v2136, %v2316
    %v2318 = vpop.f32.mrf.mxu0
    %v2319 = vadd.f32 %v2136, %v2318
    %2320 = vmatprep.mubr.f32.mxu0 0.0
    %2321 = vmatmul.mubr.f32.gmra.mxu0 %v2155
    %v2322 = vpop.f32.mrf.mxu0
    %v2323 = vadd.f32 %v2141, %v2322
    %v2324 = vpop.f32.mrf.mxu0
    %v2325 = vadd.f32 %v2141, %v2324
    %2326 = vmatprep.mubr.f32.mxu0 0.0
    %2327 = vmatmul.mubr.f32.gmra.mxu0 %v2157
    %v2328 = vpop.f32.mrf.mxu0
    %v2329 = vadd.f32 %v2146, %v2328
    %v2330 = vpop.f32.mrf.mxu0
    %v2331 = vadd.f32 %v2146, %v2330
    %2332 = vmatprep.mubr.f32.mxu0 0.0
    %2333 = vmatmul.mubr.f32.gmra.mxu0 %v2159
    %v2334 = vpop.f32.mrf.mxu0
    %v2335 = vadd.f32 %v2151, %v2334
    %v2336 = vpop.f32.mrf.mxu0
    %v2337 = vadd.f32 %v2151, %v2336
    %2338 = vdwg.mxu0
    %v2339 = vadd.f32 %v1390, %v2228
    %v2340 = vadd.f32 %v1392, %v2230
    %v2341 = vadd.f32 %v1503, %v2317
    %v2342 = vadd.f32 %v1505, %v2319
    %v2343 = vadd.f32 %v1396, %v2234
    %v2344 = vadd.f32 %v1398, %v2236
    %v2345 = vadd.f32 %v1509, %v2323
    %v2346 = vadd.f32 %v1511, %v2325
    %v2347 = vadd.f32 %v1402, %v2240
    %v2348 = vadd.f32 %v1404, %v2242
    %v2349 = vadd.f32 %v1515, %v2329
    %v2350 = vadd.f32 %v1517, %v2331
    %v2351 = vadd.f32 %v1408, %v2246
    %v2352 = vadd.f32 %v1410, %v2248
    %v2353 = vadd.f32 %v1521, %v2335
    %v2354 = vadd.f32 %v1523, %v2337
    %v2355 = vld [vmem:[#allocation5 + $0x180] sm:$0xf]
    %2357 = vset.pattern.permute.xlu0 127
    %2358 = vperm.xlu0 %2357, %v2355
    %v2359 = vpop.permute.xlu0 %2358
    %v2361 = vsel %vm1282, %v2355, 0
    %2363 = vmatprep.subr.mxu0 0.0
    %2364 = vmatpush1.msra.mxu0 0.0
    %2365 = vmatprep.subr.mxu0 0.0
    %2366 = vmatpush1.msra.mxu0 0.0
    %2367 = vmatprep.subr.mxu0 0.0
    %2368 = vmatpush1.msra.mxu0 0.0
    %2369 = vmatprep.subr.mxu0 0.0
    %2370 = vmatpush1.msra.mxu0 0.0
    %2371 = vmatprep.subr.mxu0 0.0
    %2372 = vmatpush1.msra.mxu0 0.0
    %2373 = vmatprep.subr.mxu0 0.0
    %2374 = vmatpush1.msra.mxu0 0.0
    %2375 = vmatprep.subr.mxu0 0.0
    %2376 = vmatpush1.msra.mxu0 0.0
    %2377 = vmatprep.subr.mxu0 0.0
    %2378 = vmatpush1.msra.mxu0 0.0
    %2379 = vmatprep.subr.mxu0 0.0
    %2380 = vmatpush1.msra.mxu0 0.0
    %2381 = vmatprep.subr.mxu0 0.0
    %2382 = vmatpush1.msra.mxu0 0.0
    %2383 = vmatprep.subr.mxu0 0.0
    %2384 = vmatpush1.msra.mxu0 0.0
    %2385 = vmatprep.subr.mxu0 0.0
    %2386 = vmatpush1.msra.mxu0 0.0
    %2387 = vmatprep.subr.mxu0 %v2352
    %2388 = vmatpush1.msra.mxu0 %v2351
    %2389 = vmatprep.subr.mxu0 %v2348
    %2390 = vmatpush1.msra.mxu0 %v2347
    %2391 = vmatprep.subr.mxu0 %v2344
    %2392 = vmatpush1.msra.mxu0 %v2343
    %2393 = vmatprep.subr.mxu0 %v2340
    %2394 = vmatpush1.msra.mxu0 %v2339
    %2395 = vmatprep.subr.mxu0 0.0
    %2396 = vmatpush2.msra.mxu0 0.0
    %2397 = vmatprep.subr.mxu0 0.0
    %2398 = vmatpush2.msra.mxu0 0.0
    %2399 = vmatprep.subr.mxu0 0.0
    %2400 = vmatpush2.msra.mxu0 0.0
    %2401 = vmatprep.subr.mxu0 0.0
    %2402 = vmatpush2.msra.mxu0 0.0
    %2403 = vmatprep.subr.mxu0 0.0
    %2404 = vmatpush2.msra.mxu0 0.0
    %2405 = vmatprep.subr.mxu0 0.0
    %2406 = vmatpush2.msra.mxu0 0.0
    %2407 = vmatprep.subr.mxu0 0.0
    %2408 = vmatpush2.msra.mxu0 0.0
    %2409 = vmatprep.subr.mxu0 0.0
    %2410 = vmatpush2.msra.mxu0 0.0
    %2411 = vmatprep.subr.mxu0 0.0
    %2412 = vmatpush2.msra.mxu0 0.0
    %2413 = vmatprep.subr.mxu0 0.0
    %2414 = vmatpush2.msra.mxu0 0.0
    %2415 = vmatprep.subr.mxu0 0.0
    %2416 = vmatpush2.msra.mxu0 0.0
    %2417 = vmatprep.subr.mxu0 0.0
    %2418 = vmatpush2.msra.mxu0 0.0
    %2419 = vmatprep.subr.mxu0 0.0
    %2420 = vmatpush2.msra.mxu0 0.0
    %2421 = vmatprep.subr.mxu0 0.0
    %2422 = vmatpush2.msra.mxu0 0.0
    %2423 = vmatprep.subr.mxu0 0.0
    %2424 = vmatpush2.msra.mxu0 0.0
    %2425 = vmatprep.subr.mxu0 0.0
    %2426 = vmatpush2.msra.mxu0 0.0
    %2427 = vmatprep.mubr.f32.mxu0 0.0
    %2428 = vmatmul.mubr.f32.gmra.mxu0 %v2361
    %v2429 = vpop.f32.mrf.mxu0
    %v2430 = vadd.f32 %v2359, %v2429
    %v2431 = vpop.f32.mrf.mxu0
    %v2432 = vadd.f32 %v2359, %v2431
    %2433 = vdwg.mxu0
    %2434 = vmatprep.subr.mxu0 0.0
    %2435 = vmatpush1.msra.mxu0 0.0
    %2436 = vmatprep.subr.mxu0 0.0
    %2437 = vmatpush1.msra.mxu0 0.0
    %2438 = vmatprep.subr.mxu0 0.0
    %2439 = vmatpush1.msra.mxu0 0.0
    %2440 = vmatprep.subr.mxu0 0.0
    %2441 = vmatpush1.msra.mxu0 0.0
    %2442 = vmatprep.subr.mxu0 0.0
    %2443 = vmatpush1.msra.mxu0 0.0
    %2444 = vmatprep.subr.mxu0 0.0
    %2445 = vmatpush1.msra.mxu0 0.0
    %2446 = vmatprep.subr.mxu0 0.0
    %2447 = vmatpush1.msra.mxu0 0.0
    %2448 = vmatprep.subr.mxu0 0.0
    %2449 = vmatpush1.msra.mxu0 0.0
    %2450 = vmatprep.subr.mxu0 0.0
    %2451 = vmatpush1.msra.mxu0 0.0
    %2452 = vmatprep.subr.mxu0 0.0
    %2453 = vmatpush1.msra.mxu0 0.0
    %2454 = vmatprep.subr.mxu0 0.0
    %2455 = vmatpush1.msra.mxu0 0.0
    %2456 = vmatprep.subr.mxu0 0.0
    %2457 = vmatpush1.msra.mxu0 0.0
    %2458 = vmatprep.subr.mxu0 %v2354
    %2459 = vmatpush1.msra.mxu0 %v2353
    %2460 = vmatprep.subr.mxu0 %v2350
    %2461 = vmatpush1.msra.mxu0 %v2349
    %2462 = vmatprep.subr.mxu0 %v2346
    %2463 = vmatpush1.msra.mxu0 %v2345
    %2464 = vmatprep.subr.mxu0 %v2342
    %2465 = vmatpush1.msra.mxu0 %v2341
    %2466 = vmatprep.subr.mxu0 0.0
    %2467 = vmatpush2.msra.mxu0 0.0
    %2468 = vmatprep.subr.mxu0 0.0
    %2469 = vmatpush2.msra.mxu0 0.0
    %2470 = vmatprep.subr.mxu0 0.0
    %2471 = vmatpush2.msra.mxu0 0.0
    %2472 = vmatprep.subr.mxu0 0.0
    %2473 = vmatpush2.msra.mxu0 0.0
    %2474 = vmatprep.subr.mxu0 0.0
    %2475 = vmatpush2.msra.mxu0 0.0
    %2476 = vmatprep.subr.mxu0 0.0
    %2477 = vmatpush2.msra.mxu0 0.0
    %2478 = vmatprep.subr.mxu0 0.0
    %2479 = vmatpush2.msra.mxu0 0.0
    %2480 = vmatprep.subr.mxu0 0.0
    %2481 = vmatpush2.msra.mxu0 0.0
    %2482 = vmatprep.subr.mxu0 0.0
    %2483 = vmatpush2.msra.mxu0 0.0
    %2484 = vmatprep.subr.mxu0 0.0
    %2485 = vmatpush2.msra.mxu0 0.0
    %2486 = vmatprep.subr.mxu0 0.0
    %2487 = vmatpush2.msra.mxu0 0.0
    %2488 = vmatprep.subr.mxu0 0.0
    %2489 = vmatpush2.msra.mxu0 0.0
    %2490 = vmatprep.subr.mxu0 0.0
    %2491 = vmatpush2.msra.mxu0 0.0
    %2492 = vmatprep.subr.mxu0 0.0
    %2493 = vmatpush2.msra.mxu0 0.0
    %2494 = vmatprep.subr.mxu0 0.0
    %2495 = vmatpush2.msra.mxu0 0.0
    %2496 = vmatprep.subr.mxu0 0.0
    %2497 = vmatpush2.msra.mxu0 0.0
    %2498 = vmatprep.mubr.f32.mxu0 0.0
    %2499 = vmatmul.mubr.f32.gmra.mxu0 %v2361
    %v2500 = vpop.f32.mrf.mxu0
    %v2501 = vadd.f32 %v2359, %v2500
    %v2502 = vpop.f32.mrf.mxu0
    %v2503 = vadd.f32 %v2359, %v2502
    %2504 = vdwg.mxu0
    %v2509 = vcombine.low %v2430, %v2432
    %v2510 = vcombine.low %v2501, %v2503
    %2513 = vst [vmem:[#allocation7] sm:$0xff] %v2509
    %2514 = vst [vmem:[#allocation7 + $0x8] sm:$0xff] %v2510
    // Predicated region
    $region18: #{tpu_custom_call.1} parent=1 // pred_check
      _
    $region19: #{tpu_custom_call.1} parent=1 // pred_check_branch
      %2516 = sbr.rel (0) target = $region21
    $region20: #{tpu_custom_call.1} parent=1 // pred_region
      %s2518 = ssub.s32 256, 256
      %2519 = vsyncadd [#allocation4], %s2518
      %s2521 = sshll.u32 [#allocation7], 4
      %s2522 = int_to_ptr.vmem [resolvable:$true] %s2521
      %2524 = dma.vmem_to_hbm [thread:$0]  %s2522, 256, %s2, [#allocation4]
    $region21: #{tpu_custom_call.1} parent=1 // pred_fallthru
      _
    // Predicated region
    $region22: #{tpu_custom_call.1} parent=1 // pred_check
      _
    $region23: #{tpu_custom_call.1} parent=1 // pred_check_branch
      %2526 = sbr.rel (0) target = $region25
    $region24: #{tpu_custom_call.1} parent=1 // pred_region
      %2527 = dma.done [#allocation4], 256
    $region25: #{tpu_custom_call.1} parent=1 // pred_fallthru
      _
    %2528 = vsyncpa [#allocation3], 1
    %2529 = vsyncpa [#allocation6], 1
    %2530 = vsyncpa [#allocation4], 1

</llo_original>
